<compile_context>
chip_gen: v7x
topology: tpu7x:2x2x1
jax: 0.10.0
libtpu: 0.0.40
codegen_flags: <defaults>
</compile_context>

<pallas_src>
import numpy as np
import jax
import jax.numpy as jnp
from jax import lax
from jax.experimental import pallas as pl
from jax.experimental.pallas import tpu as pltpu

EPS = 1e-5          # BatchNorm1d default eps
ALPHA_V = 0.05
ALPHA_E = 0.9
STEP = 20
LAYER_NUM = 40


# --------------------------- Pallas kernels ---------------------------------

def _pdist_kernel(x_ref, d_ref):
    """pairwise_distance on the batch-flattened point set.

    One lane-dense (B*N, C) @ (C, B*N) gram matmul instead of B small ones; the
    wrapper slices the per-batch diagonal blocks (cross-batch entries unused).
    """
    x = x_ref[...]                                              # (B*N, C)
    inner = lax.dot_general(x, x,
                            dimension_numbers=(((1,), (1,)), ((), ())),
                            preferred_element_type=jnp.float32)  # (B*N, B*N)
    sq = jnp.sum(x * x, axis=-1, keepdims=True)                  # (B*N, 1)
    d_ref[...] = sq - 2.0 * inner + jnp.transpose(sq)


def pairwise_distance(x):
    B, N, C = x.shape
    full = pl.pallas_call(
        _pdist_kernel,
        out_shape=jax.ShapeDtypeStruct((B * N, B * N), jnp.float32),
        in_specs=[pl.BlockSpec(memory_space=pltpu.MemorySpace.VMEM)],
        out_specs=pl.BlockSpec(memory_space=pltpu.MemorySpace.VMEM),
    )(x.reshape(B * N, C))
    # per-batch diagonal blocks (B is small & static)
    return jnp.stack([full[b * N:(b + 1) * N, b * N:(b + 1) * N]
                      for b in range(B)])


def _hgnn_loop_kernel(x_ref, e_ref, wv_ref, bv_ref, we_ref, be_ref,
                      qxx_ref, qex_ref, qxe_ref, qee_ref, o_ref):
    # Layout: per-batch (C, L) tiles stacked on a leading batch axis.
    #   x_ref (B, C, N), e_ref (B, C, M)
    #   qxx/qex/qxe/qee: quadrants of T^STEP per batch (N,N)/(M,N)/(N,M)/(M,M)
    B, C, N = x_ref.shape
    M = e_ref.shape[2]

    Wv = wv_ref[...]                       # (C, C) PyTorch Linear weight (out, in)
    We = we_ref[...]
    # hoist bias broadcasts out of the loops (broadcast_in_dim is not CSE'd)
    bvb = jnp.broadcast_to(bv_ref[...], (C, N))      # (C, 1) -> (C, N)
    beb = jnp.broadcast_to(be_ref[...], (C, M))

    inv_bc = 1.0 / (B * C)
    inv_bn = 1.0 / (B * N)

    def mm(a, w):
        return jnp.dot(a, w, preferred_element_type=jnp.float32)

    def bn_per_position(ts):
        # BatchNorm1d over the position axis (training mode, identity affine):
        # stats per position over (batch, channel); biased variance; eps=1e-5.
        colsum = jnp.sum(ts[0], axis=0, keepdims=True)
        for b in range(1, B):
            colsum = colsum + jnp.sum(ts[b], axis=0, keepdims=True)
        mean = colsum * inv_bc                                   # (1, L)
        ds = [t - mean for t in ts]
        varsum = jnp.sum(ds[0] * ds[0], axis=0, keepdims=True)
        for b in range(1, B):
            varsum = varsum + jnp.sum(ds[b] * ds[b], axis=0, keepdims=True)
        scale = lax.rsqrt(varsum * inv_bc + EPS)                 # (1, L)
        return [d * scale for d in ds]

    X = [x_ref[b] for b in range(B)]                             # (C, N) tiles
    E = [e_ref[b] for b in range(B)]                             # (C, M) tiles

    for _seg in range(LAYER_NUM // STEP):
        # theta + ReLU + residual   (the `i % step == 0` branch of the reference loop)
        X = [Xb + jnp.maximum(mm(Wv, Xb) + bvb, 0.0) for Xb in X]
        E = [Eb + jnp.maximum(mm(We, Eb) + beb, 0.0) for Eb in E]
        X = bn_per_position(X)
        E = bn_per_position(E)
        # TODO(synk): nn.Dropout(0.15) is treated as eval-mode identity.
        # 20 linear diffusion steps fused into one precomputed map T^20 per batch:
        Xn = [mm(X[b], qxx_ref[b]) + mm(E[b], qex_ref[b]) for b in range(B)]
        En = [mm(X[b], qxe_ref[b]) + mm(E[b], qee_ref[b]) for b in range(B)]
        X, E = Xn, En

    # DS_HGNN head: BatchNorm1d(C) over channels (training-mode stats over (B, N)),
    # ReLU, plus the input residual.  (self.conv of DS_HGNN is unused in forward.)
    rowsum = jnp.sum(X[0], axis=1, keepdims=True)
    for b in range(1, B):
        rowsum = rowsum + jnp.sum(X[b], axis=1, keepdims=True)
    mean_c = rowsum * inv_bn                                     # (C, 1)
    dX = [Xb - mean_c for Xb in X]
    varsum = jnp.sum(dX[0] * dX[0], axis=1, keepdims=True)
    for b in range(1, B):
        varsum = varsum + jnp.sum(dX[b] * dX[b], axis=1, keepdims=True)
    scale_c = lax.rsqrt(varsum * inv_bn + EPS)                   # (C, 1)
    for b in range(B):
        o_ref[b] = jnp.maximum(dX[b] * scale_c, 0.0) + x_ref[b]


def hgnn_loop(Xk, Ek, Wv, bv, We, be, Qxx, Qex, Qxe, Qee):
    B, C, N = Xk.shape
    vmem = lambda: pl.BlockSpec(memory_space=pltpu.MemorySpace.VMEM)
    # Total resident footprint is ~200 KB -> single grid-less invocation, all
    # operands in VMEM.  (The per-position BN couples batches, so a batch grid
    # axis / second TensorCore would not help at these sizes.)
    return pl.pallas_call(
        _hgnn_loop_kernel,
        out_shape=jax.ShapeDtypeStruct((B, C, N), jnp.float32),
        in_specs=[vmem() for _ in range(10)],
        out_specs=vmem(),
        compiler_params=pltpu.CompilerParams(vmem_limit_bytes=32 * 1024 * 1024),
    )(Xk, Ek, Wv, bv, We, be, Qxx, Qex, Qxe, Qee)


# ------------------------------ JAX glue -------------------------------------

def local_kernel(size, kernel_size, stride):
    # replicates torch F.unfold based local hyperedge construction
    inp = np.arange(size * size, dtype=np.int64).reshape(size, size)
    n_out = (size - kernel_size) // stride + 1
    patches = []
    for i in range(n_out):
        for j in range(n_out):
            blk = inp[i * stride:i * stride + kernel_size,
                      j * stride:j * stride + kernel_size]
            patches.append(blk.reshape(-1))
    inp_unf = np.stack(patches, axis=0)            # (edge, ks*ks)
    edge = inp_unf.shape[0]
    H_local = np.zeros((size * size, edge), dtype=np.float32)
    for e in range(edge):
        H_local[inp_unf[e], e] = 1.0
    return jnp.asarray(H_local)


def _matrix_power(mat, n):
    """mat: (..., K, K), n: static python int >= 1.  Binary exponentiation
    with batched jnp.matmul (runs once in XLA, ~5 matmuls for n=20)."""
    result = None
    base = mat
    while True:
        if n & 1:
            result = base if result is None else jnp.matmul(result, base)
        n >>= 1
        if n == 0:
            return result
        base = jnp.matmul(base, base)


def ds_hgnn_layer_forward(X, params, local_H, k_neig):
    X = X.astype(jnp.float32)
    B, N, C = X.shape

    # ---- hypergraph construction (light XLA prologue; no (B,N,N,N) one_hot) ----
    ori = pairwise_distance(X)                          # (B, N, N)
    full_inds = lax.top_k(-ori, N)[1]                   # (B, N, N): neighbours by distance
    rank = jnp.argsort(full_inds, axis=-1)              # rank[b,i,j] = position of j in i's list
    knn_mask = rank <= k_neig                           # first-pass incidence (centered orientation)
    Dv = jnp.sum(knn_mask, axis=1)                      # (B, N): vertex degree of node n
    # second pass: each node n keeps its Dv[n] nearest neighbours, plus n itself
    centered = jnp.logical_or(rank < Dv[:, :, None], jnp.eye(N, dtype=bool)[None])
    new_H = jnp.transpose(centered.astype(jnp.float32), (0, 2, 1))   # H[b, node, edge]

    # append local (unfold) hyperedges
    local_Hb = jnp.broadcast_to(local_H[None], (B,) + local_H.shape)
    _H = jnp.concatenate([new_H, local_Hb], axis=2)     # (B, N, M)
    M = _H.shape[2]

    DV = jnp.sum(_H, axis=2)                            # (B, N)
    DE = jnp.sum(_H, axis=1)                            # (B, M)
    HT = jnp.transpose(_H, (0, 2, 1))                   # (B, M, N)
    E0 = (1.0 / DE)[:, :, None] * jnp.einsum('bmn,bnc->bmc', HT, X)   # (B, M, C)
    W_ev = (1.0 / DE)[:, :, None] * HT                  # (B, M, N)
    W_ve = (1.0 / DV)[:, :, None] * _H                  # (B, N, M)

    # ---- fuse the 20 linear diffusion steps into one transition matrix ----
    # per batch (row-vector convention on [X | E], X,E of shape (C, .)):
    #   [X | E] <- [X | E] @ T,  T = [[(1-av) I_N, ae*Wev^T], [av*Wve^T, (1-ae) I_M]]
    Wve_t = jnp.transpose(W_ve, (0, 2, 1))              # (B, M, N)
    Wev_t = jnp.transpose(W_ev, (0, 2, 1))              # (B, N, M)
    I_N = jnp.broadcast_to(jnp.eye(N, dtype=jnp.float32), (B, N, N))
    I_M = jnp.broadcast_to(jnp.eye(M, dtype=jnp.float32), (B, M, M))
    T = jnp.concatenate([
        jnp.concatenate([(1.0 - ALPHA_V) * I_N, ALPHA_E * Wev_t], axis=2),
        jnp.concatenate([ALPHA_V * Wve_t, (1.0 - ALPHA_E) * I_M], axis=2)],
        axis=1)                                         # (B, N+M, N+M)
    T20 = _matrix_power(T, STEP)                        # (B, N+M, N+M)
    Qxx = T20[:, :N, :N]                                # (B, N, N)
    Qxe = T20[:, :N, N:]                                # (B, N, M)
    Qex = T20[:, N:, :N]                                # (B, M, N)
    Qee = T20[:, N:, N:]                                # (B, M, M)

    # ---- kernel operands: per-batch (C, L) tiles stacked on a batch axis ----
    Xk = jnp.transpose(X, (0, 2, 1))                    # (B, C, N)
    Ek = jnp.transpose(E0, (0, 2, 1))                   # (B, C, M)
    Wv = params['theta_vertex_w']                       # (C, C), PyTorch (out, in)
    We = params['theta_hyperedge_w']
    bv = params['theta_vertex_b'].reshape(C, 1)
    be = params['theta_hyperedge_b'].reshape(C, 1)

    out = hgnn_loop(Xk, Ek, Wv, bv, We, be, Qxx, Qex, Qxe, Qee)   # (B, C, N)
    return jnp.transpose(out, (0, 2, 1))                           # (B, N, C)


# ------------------------------ main ------------------------------------------

if __name__ == "__main__":
    B, node, in_ch = 2, 8, 16
    kernel_size, stride = 5, 2
    K_neigs = [3]
    N = node * node

    key = jax.random.PRNGKey(0)
    kx, kwv, kbv, kwe, kbe = jax.random.split(key, 5)
    bound = 1.0 / np.sqrt(in_ch)
    params = {
        'theta_vertex_w': jax.random.uniform(kwv, (in_ch, in_ch), jnp.float32, -bound, bound),
        'theta_vertex_b': jax.random.uniform(kbv, (in_ch,), jnp.float32, -bound, bound),
        'theta_hyperedge_w': jax.random.uniform(kwe, (in_ch, in_ch), jnp.float32, -bound, bound),
        'theta_hyperedge_b': jax.random.uniform(kbe, (in_ch,), jnp.float32, -bound, bound),
    }
    local_H = local_kernel(node, kernel_size, stride)

    X = jax.random.normal(kx, (B, N, in_ch), dtype=jnp.float32)

    fwd = jax.jit(ds_hgnn_layer_forward, static_argnames=('k_neig',))
    out = fwd(X, params, local_H, k_neig=K_neigs[0])
    out = jax.block_until_ready(out)
    assert out.shape == (B, N, in_ch) and out.dtype == jnp.float32
    assert bool(jnp.all(jnp.isfinite(out)))
    print("KERNEL_OK")
</pallas_src>

<mosaic_0001>
module attributes {stable_mosaic.version = 11 : i64} {
  func.func @_pdist_kernel(%arg0: memref<128x16xf32, #tpu.memory_space<vmem>>, %arg1: memref<128x128xf32, #tpu.memory_space<vmem>>) attributes {dimension_semantics = [], scalar_prefetch = 0 : i64, scratch_operands = 0 : i64, tpu.core_type = #tpu.core_type<tc>} {
    %c0 = arith.constant 0 : index
    %c0_0 = arith.constant 0 : index
    %0 = vector.load %arg0[%c0, %c0_0] : memref<128x16xf32, #tpu.memory_space<vmem>>, vector<128x16xf32>
    %cst = arith.constant dense<0.000000e+00> : vector<128x128xf32>
    %1 = tpu.matmul %0, %0, %cst {dimension_numbers = #tpu.dot_dimension_numbers<[1], [1], [0], [0], [0, 0, 1, 0], [], []>} : vector<128x16xf32>, vector<128x16xf32>, vector<128x128xf32> -> vector<128x128xf32>
    %2 = arith.mulf %0, %0 : vector<128x16xf32>
    %cst_1 = arith.constant dense<0.000000e+00> : vector<128xf32>
    %3 = vector.multi_reduction <add>, %2, %cst_1 [1] : vector<128x16xf32> to vector<128xf32>
    %4 = vector.shape_cast %3 : vector<128xf32> to vector<128x1xf32>
    %cst_2 = arith.constant 2.000000e+00 : f32
    %5 = vector.broadcast %cst_2 : f32 to vector<128x128xf32>
    %6 = arith.mulf %5, %1 : vector<128x128xf32>
    %7 = vector.broadcast %4 : vector<128x1xf32> to vector<128x128xf32>
    %8 = arith.subf %7, %6 : vector<128x128xf32>
    %9 = tpu.transpose %4, [1, 0] : vector<128x1xf32> -> vector<1x128xf32>
    %10 = vector.broadcast %9 : vector<1x128xf32> to vector<128x128xf32>
    %11 = arith.addf %8, %10 : vector<128x128xf32>
    %c0_3 = arith.constant 0 : index
    %c0_4 = arith.constant 0 : index
    %12 = vector.load %arg1[%c0_3, %c0_4] : memref<128x128xf32, #tpu.memory_space<vmem>>, vector<128x128xf32>
    tpu.vector_store %arg1[%c0_3, %c0_4], %11 {strides = array<i32>} : memref<128x128xf32, #tpu.memory_space<vmem>>, vector<128x128xf32>,
    return
  }
}

module attributes {stable_mosaic.version = 11 : i64} {
  func.func @_hgnn_loop_kernel(%arg0: memref<2x16x64xf32, #tpu.memory_space<vmem>>, %arg1: memref<2x16x68xf32, #tpu.memory_space<vmem>>, %arg2: memref<16x16xf32, #tpu.memory_space<vmem>>, %arg3: memref<16x1xf32, #tpu.memory_space<vmem>>, %arg4: memref<16x16xf32, #tpu.memory_space<vmem>>, %arg5: memref<16x1xf32, #tpu.memory_space<vmem>>, %arg6: memref<2x64x64xf32, #tpu.memory_space<vmem>>, %arg7: memref<2x68x64xf32, #tpu.memory_space<vmem>>, %arg8: memref<2x64x68xf32, #tpu.memory_space<vmem>>, %arg9: memref<2x68x68xf32, #tpu.memory_space<vmem>>, %arg10: memref<2x16x64xf32, #tpu.memory_space<vmem>>) attributes {dimension_semantics = [], scalar_prefetch = 0 : i64, scratch_operands = 0 : i64, tpu.core_type = #tpu.core_type<tc>} {
    %c0 = arith.constant 0 : index
    %c0_0 = arith.constant 0 : index
    %0 = vector.load %arg2[%c0, %c0_0] : memref<16x16xf32, #tpu.memory_space<vmem>>, vector<16x16xf32>
    %c0_1 = arith.constant 0 : index
    %c0_2 = arith.constant 0 : index
    %1 = vector.load %arg4[%c0_1, %c0_2] : memref<16x16xf32, #tpu.memory_space<vmem>>, vector<16x16xf32>
    %c0_3 = arith.constant 0 : index
    %c0_4 = arith.constant 0 : index
    %2 = vector.load %arg3[%c0_3, %c0_4] : memref<16x1xf32, #tpu.memory_space<vmem>>, vector<16x1xf32>
    %3 = vector.shape_cast %2 : vector<16x1xf32> to vector<16x1xf32>
    %4 = vector.broadcast %3 : vector<16x1xf32> to vector<16x64xf32>
    %c0_5 = arith.constant 0 : index
    %c0_6 = arith.constant 0 : index
    %5 = vector.load %arg5[%c0_5, %c0_6] : memref<16x1xf32, #tpu.memory_space<vmem>>, vector<16x1xf32>
    %6 = vector.shape_cast %5 : vector<16x1xf32> to vector<16x1xf32>
    %7 = vector.broadcast %6 : vector<16x1xf32> to vector<16x68xf32>
    %c0_7 = arith.constant 0 : index
    %c0_8 = arith.constant 0 : index
    %c0_9 = arith.constant 0 : index
    %8 = vector.load %arg0[%c0_7, %c0_8, %c0_9] : memref<2x16x64xf32, #tpu.memory_space<vmem>>, vector<1x16x64xf32>
    %9 = vector.shape_cast %8 : vector<1x16x64xf32> to vector<16x64xf32>
    %c1 = arith.constant 1 : index
    %c0_10 = arith.constant 0 : index
    %c0_11 = arith.constant 0 : index
    %10 = vector.load %arg0[%c1, %c0_10, %c0_11] : memref<2x16x64xf32, #tpu.memory_space<vmem>>, vector<1x16x64xf32>
    %11 = vector.shape_cast %10 : vector<1x16x64xf32> to vector<16x64xf32>
    %c0_12 = arith.constant 0 : index
    %c0_13 = arith.constant 0 : index
    %c0_14 = arith.constant 0 : index
    %12 = vector.load %arg1[%c0_12, %c0_13, %c0_14] : memref<2x16x68xf32, #tpu.memory_space<vmem>>, vector<1x16x68xf32>
    %13 = vector.shape_cast %12 : vector<1x16x68xf32> to vector<16x68xf32>
    %c1_15 = arith.constant 1 : index
    %c0_16 = arith.constant 0 : index
    %c0_17 = arith.constant 0 : index
    %14 = vector.load %arg1[%c1_15, %c0_16, %c0_17] : memref<2x16x68xf32, #tpu.memory_space<vmem>>, vector<1x16x68xf32>
    %15 = vector.shape_cast %14 : vector<1x16x68xf32> to vector<16x68xf32>
    %cst = arith.constant dense<0.000000e+00> : vector<16x64xf32>
    %16 = tpu.matmul %0, %9, %cst {dimension_numbers = #tpu.dot_dimension_numbers<[1], [0], [0], [1], [0, 0, 1, 1], [], []>} : vector<16x16xf32>, vector<16x64xf32>, vector<16x64xf32> -> vector<16x64xf32>
    %17 = arith.addf %16, %4 : vector<16x64xf32>
    %cst_18 = arith.constant 0.000000e+00 : f32
    %18 = vector.broadcast %cst_18 : f32 to vector<16x64xf32>
    %19 = arith.maximumf %17, %18 : vector<16x64xf32>
    %20 = arith.addf %9, %19 : vector<16x64xf32>
    %cst_19 = arith.constant dense<0.000000e+00> : vector<16x64xf32>
    %21 = tpu.matmul %0, %11, %cst_19 {dimension_numbers = #tpu.dot_dimension_numbers<[1], [0], [0], [1], [0, 0, 1, 1], [], []>} : vector<16x16xf32>, vector<16x64xf32>, vector<16x64xf32> -> vector<16x64xf32>
    %22 = arith.addf %21, %4 : vector<16x64xf32>
    %cst_20 = arith.constant 0.000000e+00 : f32
    %23 = vector.broadcast %cst_20 : f32 to vector<16x64xf32>
    %24 = arith.maximumf %22, %23 : vector<16x64xf32>
    %25 = arith.addf %11, %24 : vector<16x64xf32>
    %cst_21 = arith.constant dense<0.000000e+00> : vector<16x68xf32>
    %26 = tpu.matmul %1, %13, %cst_21 {dimension_numbers = #tpu.dot_dimension_numbers<[1], [0], [0], [1], [0, 0, 1, 1], [], []>} : vector<16x16xf32>, vector<16x68xf32>, vector<16x68xf32> -> vector<16x68xf32>
    %27 = arith.addf %26, %7 : vector<16x68xf32>
    %cst_22 = arith.constant 0.000000e+00 : f32
    %28 = vector.broadcast %cst_22 : f32 to vector<16x68xf32>
    %29 = arith.maximumf %27, %28 : vector<16x68xf32>
    %30 = arith.addf %13, %29 : vector<16x68xf32>
    %cst_23 = arith.constant dense<0.000000e+00> : vector<16x68xf32>
    %31 = tpu.matmul %1, %15, %cst_23 {dimension_numbers = #tpu.dot_dimension_numbers<[1], [0], [0], [1], [0, 0, 1, 1], [], []>} : vector<16x16xf32>, vector<16x68xf32>, vector<16x68xf32> -> vector<16x68xf32>
    %32 = arith.addf %31, %7 : vector<16x68xf32>
    %cst_24 = arith.constant 0.000000e+00 : f32
    %33 = vector.broadcast %cst_24 : f32 to vector<16x68xf32>
    %34 = arith.maximumf %32, %33 : vector<16x68xf32>
    %35 = arith.addf %15, %34 : vector<16x68xf32>
    %cst_25 = arith.constant dense<0.000000e+00> : vector<64xf32>
    %36 = vector.multi_reduction <add>, %20, %cst_25 [0] : vector<16x64xf32> to vector<64xf32>
    %37 = vector.shape_cast %36 : vector<64xf32> to vector<1x64xf32>
    %cst_26 = arith.constant dense<0.000000e+00> : vector<64xf32>
    %38 = vector.multi_reduction <add>, %25, %cst_26 [0] : vector<16x64xf32> to vector<64xf32>
    %39 = vector.shape_cast %38 : vector<64xf32> to vector<1x64xf32>
    %40 = arith.addf %37, %39 : vector<1x64xf32>
    %cst_27 = arith.constant 3.125000e-02 : f32
    %41 = vector.broadcast %cst_27 : f32 to vector<1x64xf32>
    %42 = arith.mulf %40, %41 : vector<1x64xf32>
    %43 = vector.broadcast %42 : vector<1x64xf32> to vector<16x64xf32>
    %44 = arith.subf %20, %43 : vector<16x64xf32>
    %45 = vector.broadcast %42 : vector<1x64xf32> to vector<16x64xf32>
    %46 = arith.subf %25, %45 : vector<16x64xf32>
    %47 = arith.mulf %44, %44 : vector<16x64xf32>
    %cst_28 = arith.constant dense<0.000000e+00> : vector<64xf32>
    %48 = vector.multi_reduction <add>, %47, %cst_28 [0] : vector<16x64xf32> to vector<64xf32>
    %49 = vector.shape_cast %48 : vector<64xf32> to vector<1x64xf32>
    %50 = arith.mulf %46, %46 : vector<16x64xf32>
    %cst_29 = arith.constant dense<0.000000e+00> : vector<64xf32>
    %51 = vector.multi_reduction <add>, %50, %cst_29 [0] : vector<16x64xf32> to vector<64xf32>
    %52 = vector.shape_cast %51 : vector<64xf32> to vector<1x64xf32>
    %53 = arith.addf %49, %52 : vector<1x64xf32>
    %cst_30 = arith.constant 3.125000e-02 : f32
    %54 = vector.broadcast %cst_30 : f32 to vector<1x64xf32>
    %55 = arith.mulf %53, %54 : vector<1x64xf32>
    %cst_31 = arith.constant 9.99999974E-6 : f32
    %56 = vector.broadcast %cst_31 : f32 to vector<1x64xf32>
    %57 = arith.addf %55, %56 : vector<1x64xf32>
    %58 = math.rsqrt %57 : vector<1x64xf32>
    %59 = vector.broadcast %58 : vector<1x64xf32> to vector<16x64xf32>
    %60 = arith.mulf %44, %59 : vector<16x64xf32>
    %61 = vector.broadcast %58 : vector<1x64xf32> to vector<16x64xf32>
    %62 = arith.mulf %46, %61 : vector<16x64xf32>
    %cst_32 = arith.constant dense<0.000000e+00> : vector<68xf32>
    %63 = vector.multi_reduction <add>, %30, %cst_32 [0] : vector<16x68xf32> to vector<68xf32>
    %64 = vector.shape_cast %63 : vector<68xf32> to vector<1x68xf32>
    %cst_33 = arith.constant dense<0.000000e+00> : vector<68xf32>
    %65 = vector.multi_reduction <add>, %35, %cst_33 [0] : vector<16x68xf32> to vector<68xf32>
    %66 = vector.shape_cast %65 : vector<68xf32> to vector<1x68xf32>
    %67 = arith.addf %64, %66 : vector<1x68xf32>
    %cst_34 = arith.constant 3.125000e-02 : f32
    %68 = vector.broadcast %cst_34 : f32 to vector<1x68xf32>
    %69 = arith.mulf %67, %68 : vector<1x68xf32>
    %70 = vector.broadcast %69 : vector<1x68xf32> to vector<16x68xf32>
    %71 = arith.subf %30, %70 : vector<16x68xf32>
    %72 = vector.broadcast %69 : vector<1x68xf32> to vector<16x68xf32>
    %73 = arith.subf %35, %72 : vector<16x68xf32>
    %74 = arith.mulf %71, %71 : vector<16x68xf32>
    %cst_35 = arith.constant dense<0.000000e+00> : vector<68xf32>
    %75 = vector.multi_reduction <add>, %74, %cst_35 [0] : vector<16x68xf32> to vector<68xf32>
    %76 = vector.shape_cast %75 : vector<68xf32> to vector<1x68xf32>
    %77 = arith.mulf %73, %73 : vector<16x68xf32>
    %cst_36 = arith.constant dense<0.000000e+00> : vector<68xf32>
    %78 = vector.multi_reduction <add>, %77, %cst_36 [0] : vector<16x68xf32> to vector<68xf32>
    %79 = vector.shape_cast %78 : vector<68xf32> to vector<1x68xf32>
    %80 = arith.addf %76, %79 : vector<1x68xf32>
    %cst_37 = arith.constant 3.125000e-02 : f32
    %81 = vector.broadcast %cst_37 : f32 to vector<1x68xf32>
    %82 = arith.mulf %80, %81 : vector<1x68xf32>
    %cst_38 = arith.constant 9.99999974E-6 : f32
    %83 = vector.broadcast %cst_38 : f32 to vector<1x68xf32>
    %84 = arith.addf %82, %83 : vector<1x68xf32>
    %85 = math.rsqrt %84 : vector<1x68xf32>
    %86 = vector.broadcast %85 : vector<1x68xf32> to vector<16x68xf32>
    %87 = arith.mulf %71, %86 : vector<16x68xf32>
    %88 = vector.broadcast %85 : vector<1x68xf32> to vector<16x68xf32>
    %89 = arith.mulf %73, %88 : vector<16x68xf32>
    %c0_39 = arith.constant 0 : index
    %c0_40 = arith.constant 0 : index
    %c0_41 = arith.constant 0 : index
    %90 = vector.load %arg6[%c0_39, %c0_40, %c0_41] : memref<2x64x64xf32, #tpu.memory_space<vmem>>, vector<1x64x64xf32>
    %91 = vector.shape_cast %90 : vector<1x64x64xf32> to vector<64x64xf32>
    %cst_42 = arith.constant dense<0.000000e+00> : vector<16x64xf32>
    %92 = tpu.matmul %60, %91, %cst_42 {dimension_numbers = #tpu.dot_dimension_numbers<[1], [0], [0], [1], [0, 0, 1, 1], [], []>} : vector<16x64xf32>, vector<64x64xf32>, vector<16x64xf32> -> vector<16x64xf32>
    %c0_43 = arith.constant 0 : index
    %c0_44 = arith.constant 0 : index
    %c0_45 = arith.constant 0 : index
    %93 = vector.load %arg7[%c0_43, %c0_44, %c0_45] : memref<2x68x64xf32, #tpu.memory_space<vmem>>, vector<1x68x64xf32>
    %94 = vector.shape_cast %93 : vector<1x68x64xf32> to vector<68x64xf32>
    %cst_46 = arith.constant dense<0.000000e+00> : vector<16x64xf32>
    %95 = tpu.matmul %87, %94, %cst_46 {dimension_numbers = #tpu.dot_dimension_numbers<[1], [0], [0], [1], [0, 0, 1, 1], [], []>} : vector<16x68xf32>, vector<68x64xf32>, vector<16x64xf32> -> vector<16x64xf32>
    %96 = arith.addf %92, %95 : vector<16x64xf32>
    %c1_47 = arith.constant 1 : index
    %c0_48 = arith.constant 0 : index
    %c0_49 = arith.constant 0 : index
    %97 = vector.load %arg6[%c1_47, %c0_48, %c0_49] : memref<2x64x64xf32, #tpu.memory_space<vmem>>, vector<1x64x64xf32>
    %98 = vector.shape_cast %97 : vector<1x64x64xf32> to vector<64x64xf32>
    %cst_50 = arith.constant dense<0.000000e+00> : vector<16x64xf32>
    %99 = tpu.matmul %62, %98, %cst_50 {dimension_numbers = #tpu.dot_dimension_numbers<[1], [0], [0], [1], [0, 0, 1, 1], [], []>} : vector<16x64xf32>, vector<64x64xf32>, vector<16x64xf32> -> vector<16x64xf32>
    %c1_51 = arith.constant 1 : index
    %c0_52 = arith.constant 0 : index
    %c0_53 = arith.constant 0 : index
    %100 = vector.load %arg7[%c1_51, %c0_52, %c0_53] : memref<2x68x64xf32, #tpu.memory_space<vmem>>, vector<1x68x64xf32>
    %101 = vector.shape_cast %100 : vector<1x68x64xf32> to vector<68x64xf32>
    %cst_54 = arith.constant dense<0.000000e+00> : vector<16x64xf32>
    %102 = tpu.matmul %89, %101, %cst_54 {dimension_numbers = #tpu.dot_dimension_numbers<[1], [0], [0], [1], [0, 0, 1, 1], [], []>} : vector<16x68xf32>, vector<68x64xf32>, vector<16x64xf32> -> vector<16x64xf32>
    %103 = arith.addf %99, %102 : vector<16x64xf32>
    %c0_55 = arith.constant 0 : index
    %c0_56 = arith.constant 0 : index
    %c0_57 = arith.constant 0 : index
    %104 = vector.load %arg8[%c0_55, %c0_56, %c0_57] : memref<2x64x68xf32, #tpu.memory_space<vmem>>, vector<1x64x68xf32>
    %105 = vector.shape_cast %104 : vector<1x64x68xf32> to vector<64x68xf32>
    %cst_58 = arith.constant dense<0.000000e+00> : vector<16x68xf32>
    %106 = tpu.matmul %60, %105, %cst_58 {dimension_numbers = #tpu.dot_dimension_numbers<[1], [0], [0], [1], [0, 0, 1, 1], [], []>} : vector<16x64xf32>, vector<64x68xf32>, vector<16x68xf32> -> vector<16x68xf32>
    %c0_59 = arith.constant 0 : index
    %c0_60 = arith.constant 0 : index
    %c0_61 = arith.constant 0 : index
    %107 = vector.load %arg9[%c0_59, %c0_60, %c0_61] : memref<2x68x68xf32, #tpu.memory_space<vmem>>, vector<1x68x68xf32>
    %108 = vector.shape_cast %107 : vector<1x68x68xf32> to vector<68x68xf32>
    %cst_62 = arith.constant dense<0.000000e+00> : vector<16x68xf32>
    %109 = tpu.matmul %87, %108, %cst_62 {dimension_numbers = #tpu.dot_dimension_numbers<[1], [0], [0], [1], [0, 0, 1, 1], [], []>} : vector<16x68xf32>, vector<68x68xf32>, vector<16x68xf32> -> vector<16x68xf32>
    %110 = arith.addf %106, %109 : vector<16x68xf32>
    %c1_63 = arith.constant 1 : index
    %c0_64 = arith.constant 0 : index
    %c0_65 = arith.constant 0 : index
    %111 = vector.load %arg8[%c1_63, %c0_64, %c0_65] : memref<2x64x68xf32, #tpu.memory_space<vmem>>, vector<1x64x68xf32>
    %112 = vector.shape_cast %111 : vector<1x64x68xf32> to vector<64x68xf32>
    %cst_66 = arith.constant dense<0.000000e+00> : vector<16x68xf32>
    %113 = tpu.matmul %62, %112, %cst_66 {dimension_numbers = #tpu.dot_dimension_numbers<[1], [0], [0], [1], [0, 0, 1, 1], [], []>} : vector<16x64xf32>, vector<64x68xf32>, vector<16x68xf32> -> vector<16x68xf32>
    %c1_67 = arith.constant 1 : index
    %c0_68 = arith.constant 0 : index
    %c0_69 = arith.constant 0 : index
    %114 = vector.load %arg9[%c1_67, %c0_68, %c0_69] : memref<2x68x68xf32, #tpu.memory_space<vmem>>, vector<1x68x68xf32>
    %115 = vector.shape_cast %114 : vector<1x68x68xf32> to vector<68x68xf32>
    %cst_70 = arith.constant dense<0.000000e+00> : vector<16x68xf32>
    %116 = tpu.matmul %89, %115, %cst_70 {dimension_numbers = #tpu.dot_dimension_numbers<[1], [0], [0], [1], [0, 0, 1, 1], [], []>} : vector<16x68xf32>, vector<68x68xf32>, vector<16x68xf32> -> vector<16x68xf32>
    %117 = arith.addf %113, %116 : vector<16x68xf32>
    %cst_71 = arith.constant dense<0.000000e+00> : vector<16x64xf32>
    %118 = tpu.matmul %0, %96, %cst_71 {dimension_numbers = #tpu.dot_dimension_numbers<[1], [0], [0], [1], [0, 0, 1, 1], [], []>} : vector<16x16xf32>, vector<16x64xf32>, vector<16x64xf32> -> vector<16x64xf32>
    %119 = arith.addf %118, %4 : vector<16x64xf32>
    %cst_72 = arith.constant 0.000000e+00 : f32
    %120 = vector.broadcast %cst_72 : f32 to vector<16x64xf32>
    %121 = arith.maximumf %119, %120 : vector<16x64xf32>
    %122 = arith.addf %96, %121 : vector<16x64xf32>
    %cst_73 = arith.constant dense<0.000000e+00> : vector<16x64xf32>
    %123 = tpu.matmul %0, %103, %cst_73 {dimension_numbers = #tpu.dot_dimension_numbers<[1], [0], [0], [1], [0, 0, 1, 1], [], []>} : vector<16x16xf32>, vector<16x64xf32>, vector<16x64xf32> -> vector<16x64xf32>
    %124 = arith.addf %123, %4 : vector<16x64xf32>
    %cst_74 = arith.constant 0.000000e+00 : f32
    %125 = vector.broadcast %cst_74 : f32 to vector<16x64xf32>
    %126 = arith.maximumf %124, %125 : vector<16x64xf32>
    %127 = arith.addf %103, %126 : vector<16x64xf32>
    %cst_75 = arith.constant dense<0.000000e+00> : vector<16x68xf32>
    %128 = tpu.matmul %1, %110, %cst_75 {dimension_numbers = #tpu.dot_dimension_numbers<[1], [0], [0], [1], [0, 0, 1, 1], [], []>} : vector<16x16xf32>, vector<16x68xf32>, vector<16x68xf32> -> vector<16x68xf32>
    %129 = arith.addf %128, %7 : vector<16x68xf32>
    %cst_76 = arith.constant 0.000000e+00 : f32
    %130 = vector.broadcast %cst_76 : f32 to vector<16x68xf32>
    %131 = arith.maximumf %129, %130 : vector<16x68xf32>
    %132 = arith.addf %110, %131 : vector<16x68xf32>
    %cst_77 = arith.constant dense<0.000000e+00> : vector<16x68xf32>
    %133 = tpu.matmul %1, %117, %cst_77 {dimension_numbers = #tpu.dot_dimension_numbers<[1], [0], [0], [1], [0, 0, 1, 1], [], []>} : vector<16x16xf32>, vector<16x68xf32>, vector<16x68xf32> -> vector<16x68xf32>
    %134 = arith.addf %133, %7 : vector<16x68xf32>
    %cst_78 = arith.constant 0.000000e+00 : f32
    %135 = vector.broadcast %cst_78 : f32 to vector<16x68xf32>
    %136 = arith.maximumf %134, %135 : vector<16x68xf32>
    %137 = arith.addf %117, %136 : vector<16x68xf32>
    %cst_79 = arith.constant dense<0.000000e+00> : vector<64xf32>
    %138 = vector.multi_reduction <add>, %122, %cst_79 [0] : vector<16x64xf32> to vector<64xf32>
    %139 = vector.shape_cast %138 : vector<64xf32> to vector<1x64xf32>
    %cst_80 = arith.constant dense<0.000000e+00> : vector<64xf32>
    %140 = vector.multi_reduction <add>, %127, %cst_80 [0] : vector<16x64xf32> to vector<64xf32>
    %141 = vector.shape_cast %140 : vector<64xf32> to vector<1x64xf32>
    %142 = arith.addf %139, %141 : vector<1x64xf32>
    %cst_81 = arith.constant 3.125000e-02 : f32
    %143 = vector.broadcast %cst_81 : f32 to vector<1x64xf32>
    %144 = arith.mulf %142, %143 : vector<1x64xf32>
    %145 = vector.broadcast %144 : vector<1x64xf32> to vector<16x64xf32>
    %146 = arith.subf %122, %145 : vector<16x64xf32>
    %147 = vector.broadcast %144 : vector<1x64xf32> to vector<16x64xf32>
    %148 = arith.subf %127, %147 : vector<16x64xf32>
    %149 = arith.mulf %146, %146 : vector<16x64xf32>
    %cst_82 = arith.constant dense<0.000000e+00> : vector<64xf32>
    %150 = vector.multi_reduction <add>, %149, %cst_82 [0] : vector<16x64xf32> to vector<64xf32>
    %151 = vector.shape_cast %150 : vector<64xf32> to vector<1x64xf32>
    %152 = arith.mulf %148, %148 : vector<16x64xf32>
    %cst_83 = arith.constant dense<0.000000e+00> : vector<64xf32>
    %153 = vector.multi_reduction <add>, %152, %cst_83 [0] : vector<16x64xf32> to vector<64xf32>
    %154 = vector.shape_cast %153 : vector<64xf32> to vector<1x64xf32>
    %155 = arith.addf %151, %154 : vector<1x64xf32>
    %cst_84 = arith.constant 3.125000e-02 : f32
    %156 = vector.broadcast %cst_84 : f32 to vector<1x64xf32>
    %157 = arith.mulf %155, %156 : vector<1x64xf32>
    %cst_85 = arith.constant 9.99999974E-6 : f32
    %158 = vector.broadcast %cst_85 : f32 to vector<1x64xf32>
    %159 = arith.addf %157, %158 : vector<1x64xf32>
    %160 = math.rsqrt %159 : vector<1x64xf32>
    %161 = vector.broadcast %160 : vector<1x64xf32> to vector<16x64xf32>
    %162 = arith.mulf %146, %161 : vector<16x64xf32>
    %163 = vector.broadcast %160 : vector<1x64xf32> to vector<16x64xf32>
    %164 = arith.mulf %148, %163 : vector<16x64xf32>
    %cst_86 = arith.constant dense<0.000000e+00> : vector<68xf32>
    %165 = vector.multi_reduction <add>, %132, %cst_86 [0] : vector<16x68xf32> to vector<68xf32>
    %166 = vector.shape_cast %165 : vector<68xf32> to vector<1x68xf32>
    %cst_87 = arith.constant dense<0.000000e+00> : vector<68xf32>
    %167 = vector.multi_reduction <add>, %137, %cst_87 [0] : vector<16x68xf32> to vector<68xf32>
    %168 = vector.shape_cast %167 : vector<68xf32> to vector<1x68xf32>
    %169 = arith.addf %166, %168 : vector<1x68xf32>
    %cst_88 = arith.constant 3.125000e-02 : f32
    %170 = vector.broadcast %cst_88 : f32 to vector<1x68xf32>
    %171 = arith.mulf %169, %170 : vector<1x68xf32>
    %172 = vector.broadcast %171 : vector<1x68xf32> to vector<16x68xf32>
    %173 = arith.subf %132, %172 : vector<16x68xf32>
    %174 = vector.broadcast %171 : vector<1x68xf32> to vector<16x68xf32>
    %175 = arith.subf %137, %174 : vector<16x68xf32>
    %176 = arith.mulf %173, %173 : vector<16x68xf32>
    %cst_89 = arith.constant dense<0.000000e+00> : vector<68xf32>
    %177 = vector.multi_reduction <add>, %176, %cst_89 [0] : vector<16x68xf32> to vector<68xf32>
    %178 = vector.shape_cast %177 : vector<68xf32> to vector<1x68xf32>
    %179 = arith.mulf %175, %175 : vector<16x68xf32>
    %cst_90 = arith.constant dense<0.000000e+00> : vector<68xf32>
    %180 = vector.multi_reduction <add>, %179, %cst_90 [0] : vector<16x68xf32> to vector<68xf32>
    %181 = vector.shape_cast %180 : vector<68xf32> to vector<1x68xf32>
    %182 = arith.addf %178, %181 : vector<1x68xf32>
    %cst_91 = arith.constant 3.125000e-02 : f32
    %183 = vector.broadcast %cst_91 : f32 to vector<1x68xf32>
    %184 = arith.mulf %182, %183 : vector<1x68xf32>
    %cst_92 = arith.constant 9.99999974E-6 : f32
    %185 = vector.broadcast %cst_92 : f32 to vector<1x68xf32>
    %186 = arith.addf %184, %185 : vector<1x68xf32>
    %187 = math.rsqrt %186 : vector<1x68xf32>
    %188 = vector.broadcast %187 : vector<1x68xf32> to vector<16x68xf32>
    %189 = arith.mulf %173, %188 : vector<16x68xf32>
    %190 = vector.broadcast %187 : vector<1x68xf32> to vector<16x68xf32>
    %191 = arith.mulf %175, %190 : vector<16x68xf32>
    %c0_93 = arith.constant 0 : index
    %c0_94 = arith.constant 0 : index
    %c0_95 = arith.constant 0 : index
    %192 = vector.load %arg6[%c0_93, %c0_94, %c0_95] : memref<2x64x64xf32, #tpu.memory_space<vmem>>, vector<1x64x64xf32>
    %193 = vector.shape_cast %192 : vector<1x64x64xf32> to vector<64x64xf32>
    %cst_96 = arith.constant dense<0.000000e+00> : vector<16x64xf32>
    %194 = tpu.matmul %162, %193, %cst_96 {dimension_numbers = #tpu.dot_dimension_numbers<[1], [0], [0], [1], [0, 0, 1, 1], [], []>} : vector<16x64xf32>, vector<64x64xf32>, vector<16x64xf32> -> vector<16x64xf32>
    %c0_97 = arith.constant 0 : index
    %c0_98 = arith.constant 0 : index
    %c0_99 = arith.constant 0 : index
    %195 = vector.load %arg7[%c0_97, %c0_98, %c0_99] : memref<2x68x64xf32, #tpu.memory_space<vmem>>, vector<1x68x64xf32>
    %196 = vector.shape_cast %195 : vector<1x68x64xf32> to vector<68x64xf32>
    %cst_100 = arith.constant dense<0.000000e+00> : vector<16x64xf32>
    %197 = tpu.matmul %189, %196, %cst_100 {dimension_numbers = #tpu.dot_dimension_numbers<[1], [0], [0], [1], [0, 0, 1, 1], [], []>} : vector<16x68xf32>, vector<68x64xf32>, vector<16x64xf32> -> vector<16x64xf32>
    %198 = arith.addf %194, %197 : vector<16x64xf32>
    %c1_101 = arith.constant 1 : index
    %c0_102 = arith.constant 0 : index
    %c0_103 = arith.constant 0 : index
    %199 = vector.load %arg6[%c1_101, %c0_102, %c0_103] : memref<2x64x64xf32, #tpu.memory_space<vmem>>, vector<1x64x64xf32>
    %200 = vector.shape_cast %199 : vector<1x64x64xf32> to vector<64x64xf32>
    %cst_104 = arith.constant dense<0.000000e+00> : vector<16x64xf32>
    %201 = tpu.matmul %164, %200, %cst_104 {dimension_numbers = #tpu.dot_dimension_numbers<[1], [0], [0], [1], [0, 0, 1, 1], [], []>} : vector<16x64xf32>, vector<64x64xf32>, vector<16x64xf32> -> vector<16x64xf32>
    %c1_105 = arith.constant 1 : index
    %c0_106 = arith.constant 0 : index
    %c0_107 = arith.constant 0 : index
    %202 = vector.load %arg7[%c1_105, %c0_106, %c0_107] : memref<2x68x64xf32, #tpu.memory_space<vmem>>, vector<1x68x64xf32>
    %203 = vector.shape_cast %202 : vector<1x68x64xf32> to vector<68x64xf32>
    %cst_108 = arith.constant dense<0.000000e+00> : vector<16x64xf32>
    %204 = tpu.matmul %191, %203, %cst_108 {dimension_numbers = #tpu.dot_dimension_numbers<[1], [0], [0], [1], [0, 0, 1, 1], [], []>} : vector<16x68xf32>, vector<68x64xf32>, vector<16x64xf32> -> vector<16x64xf32>
    %205 = arith.addf %201, %204 : vector<16x64xf32>
    %cst_109 = arith.constant dense<0.000000e+00> : vector<16xf32>
    %206 = vector.multi_reduction <add>, %198, %cst_109 [1] : vector<16x64xf32> to vector<16xf32>
    %207 = vector.shape_cast %206 : vector<16xf32> to vector<16x1xf32>
    %cst_110 = arith.constant dense<0.000000e+00> : vector<16xf32>
    %208 = vector.multi_reduction <add>, %205, %cst_110 [1] : vector<16x64xf32> to vector<16xf32>
    %209 = vector.shape_cast %208 : vector<16xf32> to vector<16x1xf32>
    %210 = arith.addf %207, %209 : vector<16x1xf32>
    %cst_111 = arith.constant 7.812500e-03 : f32
    %211 = vector.broadcast %cst_111 : f32 to vector<16x1xf32>
    %212 = arith.mulf %210, %211 : vector<16x1xf32>
    %213 = vector.broadcast %212 : vector<16x1xf32> to vector<16x64xf32>
    %214 = arith.subf %198, %213 : vector<16x64xf32>
    %215 = vector.broadcast %212 : vector<16x1xf32> to vector<16x64xf32>
    %216 = arith.subf %205, %215 : vector<16x64xf32>
    %217 = arith.mulf %214, %214 : vector<16x64xf32>
    %cst_112 = arith.constant dense<0.000000e+00> : vector<16xf32>
    %218 = vector.multi_reduction <add>, %217, %cst_112 [1] : vector<16x64xf32> to vector<16xf32>
    %219 = vector.shape_cast %218 : vector<16xf32> to vector<16x1xf32>
    %220 = arith.mulf %216, %216 : vector<16x64xf32>
    %cst_113 = arith.constant dense<0.000000e+00> : vector<16xf32>
    %221 = vector.multi_reduction <add>, %220, %cst_113 [1] : vector<16x64xf32> to vector<16xf32>
    %222 = vector.shape_cast %221 : vector<16xf32> to vector<16x1xf32>
    %223 = arith.addf %219, %222 : vector<16x1xf32>
    %cst_114 = arith.constant 7.812500e-03 : f32
    %224 = vector.broadcast %cst_114 : f32 to vector<16x1xf32>
    %225 = arith.mulf %223, %224 : vector<16x1xf32>
    %cst_115 = arith.constant 9.99999974E-6 : f32
    %226 = vector.broadcast %cst_115 : f32 to vector<16x1xf32>
    %227 = arith.addf %225, %226 : vector<16x1xf32>
    %228 = math.rsqrt %227 : vector<16x1xf32>
    %229 = vector.broadcast %228 : vector<16x1xf32> to vector<16x64xf32>
    %230 = arith.mulf %214, %229 : vector<16x64xf32>
    %cst_116 = arith.constant 0.000000e+00 : f32
    %231 = vector.broadcast %cst_116 : f32 to vector<16x64xf32>
    %232 = arith.maximumf %230, %231 : vector<16x64xf32>
    %c0_117 = arith.constant 0 : index
    %c0_118 = arith.constant 0 : index
    %c0_119 = arith.constant 0 : index
    %233 = vector.load %arg0[%c0_117, %c0_118, %c0_119] : memref<2x16x64xf32, #tpu.memory_space<vmem>>, vector<1x16x64xf32>
    %234 = vector.shape_cast %233 : vector<1x16x64xf32> to vector<16x64xf32>
    %235 = arith.addf %232, %234 : vector<16x64xf32>
    %c0_120 = arith.constant 0 : index
    %c0_121 = arith.constant 0 : index
    %c0_122 = arith.constant 0 : index
    %236 = vector.load %arg10[%c0_120, %c0_121, %c0_122] : memref<2x16x64xf32, #tpu.memory_space<vmem>>, vector<1x16x64xf32>
    %237 = vector.shape_cast %236 : vector<1x16x64xf32> to vector<16x64xf32>
    %238 = vector.shape_cast %235 : vector<16x64xf32> to vector<1x16x64xf32>
    tpu.vector_store %arg10[%c0_120, %c0_121, %c0_122], %238 {strides = array<i32>} : memref<2x16x64xf32, #tpu.memory_space<vmem>>, vector<1x16x64xf32>,
    %239 = vector.broadcast %228 : vector<16x1xf32> to vector<16x64xf32>
    %240 = arith.mulf %216, %239 : vector<16x64xf32>
    %cst_123 = arith.constant 0.000000e+00 : f32
    %241 = vector.broadcast %cst_123 : f32 to vector<16x64xf32>
    %242 = arith.maximumf %240, %241 : vector<16x64xf32>
    %c1_124 = arith.constant 1 : index
    %c0_125 = arith.constant 0 : index
    %c0_126 = arith.constant 0 : index
    %243 = vector.load %arg0[%c1_124, %c0_125, %c0_126] : memref<2x16x64xf32, #tpu.memory_space<vmem>>, vector<1x16x64xf32>
    %244 = vector.shape_cast %243 : vector<1x16x64xf32> to vector<16x64xf32>
    %245 = arith.addf %242, %244 : vector<16x64xf32>
    %c1_127 = arith.constant 1 : index
    %c0_128 = arith.constant 0 : index
    %c0_129 = arith.constant 0 : index
    %246 = vector.load %arg10[%c1_127, %c0_128, %c0_129] : memref<2x16x64xf32, #tpu.memory_space<vmem>>, vector<1x16x64xf32>
    %247 = vector.shape_cast %246 : vector<1x16x64xf32> to vector<16x64xf32>
    %248 = vector.shape_cast %245 : vector<16x64xf32> to vector<1x16x64xf32>
    tpu.vector_store %arg10[%c1_127, %c0_128, %c0_129], %248 {strides = array<i32>} : memref<2x16x64xf32, #tpu.memory_space<vmem>>, vector<1x16x64xf32>,
    return
  }
}

</mosaic_0001>

<llo_original>
// kernel: ds_hgnn_layer_forward.2
$region0: #{ds_hgnn_layer_forward.2}
  #allocation0 [shape = 'u32[]', space=smem, size = 0x4, offset = 0x4, fixed_abs, tag = 'smem constant byte address 0x4 - core index']
  #allocation1 [shape = 'u32[144,128]{1,0:T(1,128)}', space=vmem, size = 0x12000, scoped, tag = 'internal scratch']
  %s0 = inlined_call_operand.vmem [shape: f32[128,16], index: 0, kind: input, shape index: {}]
  %s1 = inlined_call_operand.vmem [shape: f32[128,128], index: 1, kind: output, shape index: {}]
  %s2 = sld [smem:[#allocation0]]
  $region14: #{ds_hgnn_layer_forward.2} parent=0
    _
  %s4 = ssub.s32 1, %s2
  %s5 = scalar_select 0, %s4, %s2
  // Predicated region
  $region2: #{ds_hgnn_layer_forward.2} parent=0 // pred_check
    _
  $region3: #{ds_hgnn_layer_forward.2} parent=0 // pred_check_branch
    %7 = sbr.rel (0) target = $region5
  $region4: #{ds_hgnn_layer_forward.2} parent=0 // pred_region
    _
  $region5: #{ds_hgnn_layer_forward.2} parent=0 // pred_fallthru
    _
  %v8 = vld [vmem:[%s0] sm:$0xff]
  %v9 = vld [vmem:[%s0 + $0x8] sm:$0xff]
  %v10 = vld [vmem:[%s0 + $0x10] sm:$0xff]
  %v11 = vld [vmem:[%s0 + $0x18] sm:$0xff]
  %v12 = vld [vmem:[%s0 + $0x20] sm:$0xff]
  %v13 = vld [vmem:[%s0 + $0x28] sm:$0xff]
  %v14 = vld [vmem:[%s0 + $0x30] sm:$0xff]
  %v15 = vld [vmem:[%s0 + $0x38] sm:$0xff]
  %v16 = vld [vmem:[%s0 + $0x40] sm:$0xff]
  %v17 = vld [vmem:[%s0 + $0x48] sm:$0xff]
  %v18 = vld [vmem:[%s0 + $0x50] sm:$0xff]
  %v19 = vld [vmem:[%s0 + $0x58] sm:$0xff]
  %v20 = vld [vmem:[%s0 + $0x60] sm:$0xff]
  %v21 = vld [vmem:[%s0 + $0x68] sm:$0xff]
  %v22 = vld [vmem:[%s0 + $0x70] sm:$0xff]
  %v23 = vld [vmem:[%s0 + $0x78] sm:$0xff]
  %vm24 = vcmask 130048
  %v26 = vsel %vm24, %v8, 0
  %v29 = vsel %vm24, %v9, 0
  %v32 = vsel %vm24, %v10, 0
  %v35 = vsel %vm24, %v11, 0
  %v38 = vsel %vm24, %v12, 0
  %v41 = vsel %vm24, %v13, 0
  %v44 = vsel %vm24, %v14, 0
  %v47 = vsel %vm24, %v15, 0
  %v50 = vsel %vm24, %v16, 0
  %v53 = vsel %vm24, %v17, 0
  %v56 = vsel %vm24, %v18, 0
  %v59 = vsel %vm24, %v19, 0
  %v62 = vsel %vm24, %v20, 0
  %v65 = vsel %vm24, %v21, 0
  %v68 = vsel %vm24, %v22, 0
  %v71 = vsel %vm24, %v23, 0
  %73 = vmatprep.subr.mxu0 0.0
  %74 = vmatpush1.xpose.msra.mxu0 %v26
  %75 = vmatprep.subr.mxu0 0.0
  %76 = vmatpush1.xpose.msra.mxu0 %v29
  %77 = vmatprep.subr.mxu0 0.0
  %78 = vmatpush1.xpose.msra.mxu0 %v32
  %79 = vmatprep.subr.mxu0 0.0
  %80 = vmatpush1.xpose.msra.mxu0 %v35
  %81 = vmatprep.subr.mxu0 0.0
  %82 = vmatpush1.xpose.msra.mxu0 %v38
  %83 = vmatprep.subr.mxu0 0.0
  %84 = vmatpush1.xpose.msra.mxu0 %v41
  %85 = vmatprep.subr.mxu0 0.0
  %86 = vmatpush1.xpose.msra.mxu0 %v44
  %87 = vmatprep.subr.mxu0 0.0
  %88 = vmatpush1.xpose.msra.mxu0 %v47
  %89 = vmatprep.subr.mxu0 0.0
  %90 = vmatpush1.xpose.msra.mxu0 %v50
  %91 = vmatprep.subr.mxu0 0.0
  %92 = vmatpush1.xpose.msra.mxu0 %v53
  %93 = vmatprep.subr.mxu0 0.0
  %94 = vmatpush1.xpose.msra.mxu0 %v56
  %95 = vmatprep.subr.mxu0 0.0
  %96 = vmatpush1.xpose.msra.mxu0 %v59
  %97 = vmatprep.subr.mxu0 0.0
  %98 = vmatpush1.xpose.msra.mxu0 %v62
  %99 = vmatprep.subr.mxu0 0.0
  %100 = vmatpush1.xpose.msra.mxu0 %v65
  %101 = vmatprep.subr.mxu0 0.0
  %102 = vmatpush1.xpose.msra.mxu0 %v68
  %103 = vmatprep.subr.mxu0 0.0
  %104 = vmatpush1.xpose.msra.mxu0 %v71
  %105 = vmatprep.subr.mxu0 0.0
  %106 = vmatpush1.xpose.msra.mxu0 0.0
  %107 = vmatprep.subr.mxu0 0.0
  %108 = vmatpush1.xpose.msra.mxu0 0.0
  %109 = vmatprep.subr.mxu0 0.0
  %110 = vmatpush1.xpose.msra.mxu0 0.0
  %111 = vmatprep.subr.mxu0 0.0
  %112 = vmatpush1.xpose.msra.mxu0 0.0
  %113 = vmatprep.subr.mxu0 0.0
  %114 = vmatpush1.xpose.msra.mxu0 0.0
  %115 = vmatprep.subr.mxu0 0.0
  %116 = vmatpush1.xpose.msra.mxu0 0.0
  %117 = vmatprep.subr.mxu0 0.0
  %118 = vmatpush1.xpose.msra.mxu0 0.0
  %119 = vmatprep.subr.mxu0 0.0
  %120 = vmatpush1.xpose.msra.mxu0 0.0
  %121 = vmatprep.subr.mxu0 0.0
  %122 = vmatpush1.xpose.msra.mxu0 0.0
  %123 = vmatprep.subr.mxu0 0.0
  %124 = vmatpush1.xpose.msra.mxu0 0.0
  %125 = vmatprep.subr.mxu0 0.0
  %126 = vmatpush1.xpose.msra.mxu0 0.0
  %127 = vmatprep.subr.mxu0 0.0
  %128 = vmatpush1.xpose.msra.mxu0 0.0
  %129 = vmatprep.subr.mxu0 0.0
  %130 = vmatpush1.xpose.msra.mxu0 0.0
  %131 = vmatprep.subr.mxu0 0.0
  %132 = vmatpush1.xpose.msra.mxu0 0.0
  %133 = vmatprep.subr.mxu0 0.0
  %134 = vmatpush1.xpose.msra.mxu0 0.0
  %135 = vmatprep.subr.mxu0 0.0
  %136 = vmatpush1.xpose.msra.mxu0 0.0
  %137 = vmatprep.mubr.f32.mxu0 0.0
  %138 = vmatmul.mubr.f32.gmra.mrb[0].mxu0 %v26
  %v139 = vpop.f32.mrb[0].mxu0
  %v140 = vadd.f32 0.0, %v139
  %v141 = vpop.f32.mrb[0].mxu0
  %142 = vmatprep.mubr.f32.mxu0 0.0
  %143 = vmatmul.mubr.f32.gmra.mrb[0].mxu0 %v29
  %v144 = vpop.f32.mrb[0].mxu0
  %v145 = vadd.f32 0.0, %v144
  %v146 = vpop.f32.mrb[0].mxu0
  %147 = vmatprep.mubr.f32.mxu0 0.0
  %148 = vmatmul.mubr.f32.gmra.mrb[0].mxu0 %v32
  %v149 = vpop.f32.mrb[0].mxu0
  %v150 = vadd.f32 0.0, %v149
  %v151 = vpop.f32.mrb[0].mxu0
  %152 = vmatprep.mubr.f32.mxu0 0.0
  %153 = vmatmul.mubr.f32.gmra.mrb[0].mxu0 %v35
  %v154 = vpop.f32.mrb[0].mxu0
  %v155 = vadd.f32 0.0, %v154
  %v156 = vpop.f32.mrb[0].mxu0
  %157 = vmatprep.mubr.f32.mxu0 0.0
  %158 = vmatmul.mubr.f32.gmra.mrb[0].mxu0 %v38
  %v159 = vpop.f32.mrb[0].mxu0
  %v160 = vadd.f32 0.0, %v159
  %v161 = vpop.f32.mrb[0].mxu0
  %162 = vmatprep.mubr.f32.mxu0 0.0
  %163 = vmatmul.mubr.f32.gmra.mrb[0].mxu0 %v41
  %v164 = vpop.f32.mrb[0].mxu0
  %v165 = vadd.f32 0.0, %v164
  %v166 = vpop.f32.mrb[0].mxu0
  %167 = vmatprep.mubr.f32.mxu0 0.0
  %168 = vmatmul.mubr.f32.gmra.mrb[0].mxu0 %v44
  %v169 = vpop.f32.mrb[0].mxu0
  %v170 = vadd.f32 0.0, %v169
  %v171 = vpop.f32.mrb[0].mxu0
  %172 = vmatprep.mubr.f32.mxu0 0.0
  %173 = vmatmul.mubr.f32.gmra.mrb[0].mxu0 %v47
  %v174 = vpop.f32.mrb[0].mxu0
  %v175 = vadd.f32 0.0, %v174
  %v176 = vpop.f32.mrb[0].mxu0
  %177 = vmatprep.mubr.f32.mxu0 0.0
  %178 = vmatmul.mubr.f32.gmra.mrb[0].mxu0 %v50
  %v179 = vpop.f32.mrb[0].mxu0
  %v180 = vadd.f32 0.0, %v179
  %v181 = vpop.f32.mrb[0].mxu0
  %182 = vmatprep.mubr.f32.mxu0 0.0
  %183 = vmatmul.mubr.f32.gmra.mrb[0].mxu0 %v53
  %v184 = vpop.f32.mrb[0].mxu0
  %v185 = vadd.f32 0.0, %v184
  %v186 = vpop.f32.mrb[0].mxu0
  %187 = vmatprep.mubr.f32.mxu0 0.0
  %188 = vmatmul.mubr.f32.gmra.mrb[0].mxu0 %v56
  %v189 = vpop.f32.mrb[0].mxu0
  %v190 = vadd.f32 0.0, %v189
  %v191 = vpop.f32.mrb[0].mxu0
  %192 = vmatprep.mubr.f32.mxu0 0.0
  %193 = vmatmul.mubr.f32.gmra.mrb[0].mxu0 %v59
  %v194 = vpop.f32.mrb[0].mxu0
  %v195 = vadd.f32 0.0, %v194
  %v196 = vpop.f32.mrb[0].mxu0
  %197 = vmatprep.mubr.f32.mxu0 0.0
  %198 = vmatmul.mubr.f32.gmra.mrb[0].mxu0 %v62
  %v199 = vpop.f32.mrb[0].mxu0
  %v200 = vadd.f32 0.0, %v199
  %v201 = vpop.f32.mrb[0].mxu0
  %202 = vmatprep.mubr.f32.mxu0 0.0
  %203 = vmatmul.mubr.f32.gmra.mrb[0].mxu0 %v65
  %v204 = vpop.f32.mrb[0].mxu0
  %v205 = vadd.f32 0.0, %v204
  %v206 = vpop.f32.mrb[0].mxu0
  %207 = vmatprep.mubr.f32.mxu0 0.0
  %208 = vmatmul.mubr.f32.gmra.mrb[0].mxu0 %v68
  %v209 = vpop.f32.mrb[0].mxu0
  %v210 = vadd.f32 0.0, %v209
  %v211 = vpop.f32.mrb[0].mxu0
  %212 = vmatprep.mubr.f32.mxu0 0.0
  %213 = vmatmul.mubr.f32.gmra.mrb[0].mxu0 %v71
  %v214 = vpop.f32.mrb[0].mxu0
  %v215 = vadd.f32 0.0, %v214
  %v216 = vpop.f32.mrb[0].mxu0
  %217 = vdwg.mxu0
  %v218 = vmul.f32 %v8, %v8
  %v219 = vmul.f32 %v9, %v9
  %v220 = vmul.f32 %v10, %v10
  %v221 = vmul.f32 %v11, %v11
  %v222 = vmul.f32 %v12, %v12
  %v223 = vmul.f32 %v13, %v13
  %v224 = vmul.f32 %v14, %v14
  %v225 = vmul.f32 %v15, %v15
  %v226 = vmul.f32 %v16, %v16
  %v227 = vmul.f32 %v17, %v17
  %v228 = vmul.f32 %v18, %v18
  %v229 = vmul.f32 %v19, %v19
  %v230 = vmul.f32 %v20, %v20
  %v231 = vmul.f32 %v21, %v21
  %v232 = vmul.f32 %v22, %v22
  %v233 = vmul.f32 %v23, %v23
  %v234 = vsel %vm24, %v218, 0.0
  %235 = vadd.xlane.f32.xlu0 %v234
  %v236 = vpop.xlane.xlu0 %235
  %v237 = vsel %vm24, %v219, 0.0
  %238 = vadd.xlane.f32.xlu0 %v237
  %v239 = vpop.xlane.xlu0 %238
  %v240 = vsel %vm24, %v220, 0.0
  %241 = vadd.xlane.f32.xlu0 %v240
  %v242 = vpop.xlane.xlu0 %241
  %v243 = vsel %vm24, %v221, 0.0
  %244 = vadd.xlane.f32.xlu0 %v243
  %v245 = vpop.xlane.xlu0 %244
  %v246 = vsel %vm24, %v222, 0.0
  %247 = vadd.xlane.f32.xlu0 %v246
  %v248 = vpop.xlane.xlu0 %247
  %v249 = vsel %vm24, %v223, 0.0
  %250 = vadd.xlane.f32.xlu0 %v249
  %v251 = vpop.xlane.xlu0 %250
  %v252 = vsel %vm24, %v224, 0.0
  %253 = vadd.xlane.f32.xlu0 %v252
  %v254 = vpop.xlane.xlu0 %253
  %v255 = vsel %vm24, %v225, 0.0
  %256 = vadd.xlane.f32.xlu0 %v255
  %v257 = vpop.xlane.xlu0 %256
  %v258 = vsel %vm24, %v226, 0.0
  %259 = vadd.xlane.f32.xlu0 %v258
  %v260 = vpop.xlane.xlu0 %259
  %v261 = vsel %vm24, %v227, 0.0
  %262 = vadd.xlane.f32.xlu0 %v261
  %v263 = vpop.xlane.xlu0 %262
  %v264 = vsel %vm24, %v228, 0.0
  %265 = vadd.xlane.f32.xlu0 %v264
  %v266 = vpop.xlane.xlu0 %265
  %v267 = vsel %vm24, %v229, 0.0
  %268 = vadd.xlane.f32.xlu0 %v267
  %v269 = vpop.xlane.xlu0 %268
  %v270 = vsel %vm24, %v230, 0.0
  %271 = vadd.xlane.f32.xlu0 %v270
  %v272 = vpop.xlane.xlu0 %271
  %v273 = vsel %vm24, %v231, 0.0
  %274 = vadd.xlane.f32.xlu0 %v273
  %v275 = vpop.xlane.xlu0 %274
  %v276 = vsel %vm24, %v232, 0.0
  %277 = vadd.xlane.f32.xlu0 %v276
  %v278 = vpop.xlane.xlu0 %277
  %v279 = vsel %vm24, %v233, 0.0
  %280 = vadd.xlane.f32.xlu0 %v279
  %v281 = vpop.xlane.xlu0 %280
  %v282 = vmul.f32 %v140, 2.0
  %v283 = vmul.f32 %v145, 2.0
  %v284 = vmul.f32 %v150, 2.0
  %v285 = vmul.f32 %v155, 2.0
  %v286 = vmul.f32 %v160, 2.0
  %v287 = vmul.f32 %v165, 2.0
  %v288 = vmul.f32 %v170, 2.0
  %v289 = vmul.f32 %v175, 2.0
  %v290 = vmul.f32 %v180, 2.0
  %v291 = vmul.f32 %v185, 2.0
  %v292 = vmul.f32 %v190, 2.0
  %v293 = vmul.f32 %v195, 2.0
  %v294 = vmul.f32 %v200, 2.0
  %v295 = vmul.f32 %v205, 2.0
  %v296 = vmul.f32 %v210, 2.0
  %v297 = vmul.f32 %v215, 2.0
  %v298 = vsub.f32 %v236, %v282
  %v299 = vsub.f32 %v239, %v283
  %v300 = vsub.f32 %v242, %v284
  %v301 = vsub.f32 %v245, %v285
  %v302 = vsub.f32 %v248, %v286
  %v303 = vsub.f32 %v251, %v287
  %v304 = vsub.f32 %v254, %v288
  %v305 = vsub.f32 %v257, %v289
  %v306 = vsub.f32 %v260, %v290
  %v307 = vsub.f32 %v263, %v291
  %v308 = vsub.f32 %v266, %v292
  %v309 = vsub.f32 %v269, %v293
  %v310 = vsub.f32 %v272, %v294
  %v311 = vsub.f32 %v275, %v295
  %v312 = vsub.f32 %v278, %v296
  %v313 = vsub.f32 %v281, %v297
  %314 = vxpose.xlu0.b32.start [1/16] %v236, 128
  %315 = vxpose.xlu0.b32.cont [2/16] %v239, 128
  %316 = vxpose.xlu0.b32.cont [3/16] %v242, 128
  %317 = vxpose.xlu0.b32.cont [4/16] %v245, 128
  %318 = vxpose.xlu0.b32.cont [5/16] %v248, 128
  %319 = vxpose.xlu0.b32.cont [6/16] %v251, 128
  %320 = vxpose.xlu0.b32.cont [7/16] %v254, 128
  %321 = vxpose.xlu0.b32.cont [8/16] %v257, 128
  %322 = vxpose.xlu0.b32.cont [9/16] %v260, 128
  %323 = vxpose.xlu0.b32.cont [10/16] %v263, 128
  %324 = vxpose.xlu0.b32.cont [11/16] %v266, 128
  %325 = vxpose.xlu0.b32.cont [12/16] %v269, 128
  %326 = vxpose.xlu0.b32.cont [13/16] %v272, 128
  %327 = vxpose.xlu0.b32.cont [14/16] %v275, 128
  %328 = vxpose.xlu0.b32.cont [15/16] %v278, 128
  %329 = vxpose.xlu0.b32.end [16/16] %v281, 128
  %v330 = vpop.trf.xlu0
  %v331 = vpop.trf.xlu0
  %v332 = vpop.trf.xlu0
  %v333 = vpop.trf.xlu0
  %v334 = vpop.trf.xlu0
  %v335 = vpop.trf.xlu0
  %v336 = vpop.trf.xlu0
  %v337 = vpop.trf.xlu0
  %v338 = vpop.trf.xlu0
  %v339 = vpop.trf.xlu0
  %v340 = vpop.trf.xlu0
  %v341 = vpop.trf.xlu0
  %v342 = vpop.trf.xlu0
  %v343 = vpop.trf.xlu0
  %v344 = vpop.trf.xlu0
  %v345 = vpop.trf.xlu0
  %v346 = vlaneseq
  %v347 = vshrl.u32 %v346, 7
  %v348 = vsub.s32 0, %v347
  %v349 = vrot.slane %v330, %v348
  %v350 = vadd.f32 %v298, %v349
  %v351 = vadd.f32 %v299, %v349
  %v352 = vadd.f32 %v300, %v349
  %v353 = vadd.f32 %v301, %v349
  %v354 = vadd.f32 %v302, %v349
  %v355 = vadd.f32 %v303, %v349
  %v356 = vadd.f32 %v304, %v349
  %v357 = vadd.f32 %v305, %v349
  %v358 = vadd.f32 %v306, %v349
  %v359 = vadd.f32 %v307, %v349
  %v360 = vadd.f32 %v308, %v349
  %v361 = vadd.f32 %v309, %v349
  %v362 = vadd.f32 %v310, %v349
  %v363 = vadd.f32 %v311, %v349
  %v364 = vadd.f32 %v312, %v349
  %v365 = vadd.f32 %v313, %v349
  %366 = vst [vmem:[%s1] sm:$0xff] %v350
  %367 = vst [vmem:[%s1 + $0x8] sm:$0xff] %v351
  %368 = vst [vmem:[%s1 + $0x10] sm:$0xff] %v352
  %369 = vst [vmem:[%s1 + $0x18] sm:$0xff] %v353
  %370 = vst [vmem:[%s1 + $0x20] sm:$0xff] %v354
  %371 = vst [vmem:[%s1 + $0x28] sm:$0xff] %v355
  %372 = vst [vmem:[%s1 + $0x30] sm:$0xff] %v356
  %373 = vst [vmem:[%s1 + $0x38] sm:$0xff] %v357
  %374 = vst [vmem:[%s1 + $0x40] sm:$0xff] %v358
  %375 = vst [vmem:[%s1 + $0x48] sm:$0xff] %v359
  %376 = vst [vmem:[%s1 + $0x50] sm:$0xff] %v360
  %377 = vst [vmem:[%s1 + $0x58] sm:$0xff] %v361
  %378 = vst [vmem:[%s1 + $0x60] sm:$0xff] %v362
  %379 = vst [vmem:[%s1 + $0x68] sm:$0xff] %v363
  %380 = vst [vmem:[%s1 + $0x70] sm:$0xff] %v364
  %381 = vst [vmem:[%s1 + $0x78] sm:$0xff] %v365
  // Predicated region
  $region6: #{ds_hgnn_layer_forward.2} parent=0 // pred_check
    _
  $region7: #{ds_hgnn_layer_forward.2} parent=0 // pred_check_branch
    %383 = sbr.rel (0) target = $region9
  $region8: #{ds_hgnn_layer_forward.2} parent=0 // pred_region
    _
  $region9: #{ds_hgnn_layer_forward.2} parent=0 // pred_fallthru
    _
  // Predicated region
  $region10: #{ds_hgnn_layer_forward.2} parent=0 // pred_check
    _
  $region11: #{ds_hgnn_layer_forward.2} parent=0 // pred_check_branch
    %385 = sbr.rel (0) target = $region13
  $region12: #{ds_hgnn_layer_forward.2} parent=0 // pred_region
    _
  $region13: #{ds_hgnn_layer_forward.2} parent=0 // pred_fallthru
    _

// kernel: ds_hgnn_layer_forward.3
$region0: #{ds_hgnn_layer_forward.3}
  #allocation0 [shape = 'u32[]', space=smem, size = 0x4, offset = 0x4, fixed_abs, tag = 'smem constant byte address 0x4 - core index']
  #allocation1 [shape = 'u32[144,128]{1,0:T(1,128)}', space=vmem, size = 0x12000, scoped, tag = 'internal scratch']
  %s0 = inlined_call_operand.vmem [shape: f32[2,16,64], index: 0, kind: input, shape index: {}]
  %s1 = inlined_call_operand.vmem [shape: f32[2,16,68], index: 1, kind: input, shape index: {}]
  %s2 = inlined_call_operand.vmem [shape: f32[16,16], index: 2, kind: input, shape index: {}]
  %s3 = inlined_call_operand.vmem [shape: f32[16,1], index: 3, kind: input, shape index: {}]
  %s4 = inlined_call_operand.vmem [shape: f32[16,16], index: 4, kind: input, shape index: {}]
  %s5 = inlined_call_operand.vmem [shape: f32[16,1], index: 5, kind: input, shape index: {}]
  %s6 = inlined_call_operand.vmem [shape: f32[2,64,64], index: 6, kind: input, shape index: {}]
  %s7 = inlined_call_operand.vmem [shape: f32[2,68,64], index: 7, kind: input, shape index: {}]
  %s8 = inlined_call_operand.vmem [shape: f32[2,64,68], index: 8, kind: input, shape index: {}]
  %s9 = inlined_call_operand.vmem [shape: f32[2,68,68], index: 9, kind: input, shape index: {}]
  %s10 = inlined_call_operand.hbm [shape: f32[2,16,64], index: 10, kind: output, shape index: {}]
  %s11 = sld [smem:[#allocation0]]
  $region50: #{ds_hgnn_layer_forward.3} parent=0
    _
  %s13 = ssub.s32 1, %s11
  %s14 = scalar_select 0, %s13, %s11
  $region1: #{ds_hgnn_layer_forward.3} parent=0
    #allocation2 [shape = 'u8[16384]{0}', space=vmem, size = 0x4000, scoped, tag = 'output window, operand 0, single buffered']
    #allocation3 [shape = 's32[1]{0}', space=sflag, size = 0x4, scoped, tag = 'scoped memory for ds_hgnn_layer_forward.3']
    %15 = vsyncpa [#allocation3], 0
    // Predicated region
    $region2: #{ds_hgnn_layer_forward.3} parent=1 // pred_check
      _
    $region3: #{ds_hgnn_layer_forward.3} parent=1 // pred_check_branch
      %17 = sbr.rel (0) target = $region5
    $region4: #{ds_hgnn_layer_forward.3} parent=1 // pred_region
      _
    $region5: #{ds_hgnn_layer_forward.3} parent=1 // pred_fallthru
      _
    // Predicated region
    $region6: #{ds_hgnn_layer_forward.3} parent=1 // pred_check
      _
    $region7: #{ds_hgnn_layer_forward.3} parent=1 // pred_check_branch
      %19 = sbr.rel (0) target = $region9
    $region8: #{ds_hgnn_layer_forward.3} parent=1 // pred_region
      _
    $region9: #{ds_hgnn_layer_forward.3} parent=1 // pred_fallthru
      _
    // Predicated region
    $region10: #{ds_hgnn_layer_forward.3} parent=1 // pred_check
      _
    $region11: #{ds_hgnn_layer_forward.3} parent=1 // pred_check_branch
      %21 = sbr.rel (0) target = $region13
    $region12: #{ds_hgnn_layer_forward.3} parent=1 // pred_region
      _
    $region13: #{ds_hgnn_layer_forward.3} parent=1 // pred_fallthru
      _
    // Predicated region
    $region14: #{ds_hgnn_layer_forward.3} parent=1 // pred_check
      _
    $region15: #{ds_hgnn_layer_forward.3} parent=1 // pred_check_branch
      %23 = sbr.rel (0) target = $region17
    $region16: #{ds_hgnn_layer_forward.3} parent=1 // pred_region
      _
    $region17: #{ds_hgnn_layer_forward.3} parent=1 // pred_fallthru
      _
    // Predicated region
    $region18: #{ds_hgnn_layer_forward.3} parent=1 // pred_check
      _
    $region19: #{ds_hgnn_layer_forward.3} parent=1 // pred_check_branch
      %25 = sbr.rel (0) target = $region21
    $region20: #{ds_hgnn_layer_forward.3} parent=1 // pred_region
      _
    $region21: #{ds_hgnn_layer_forward.3} parent=1 // pred_fallthru
      _
    // Predicated region
    $region22: #{ds_hgnn_layer_forward.3} parent=1 // pred_check
      _
    $region23: #{ds_hgnn_layer_forward.3} parent=1 // pred_check_branch
      %27 = sbr.rel (0) target = $region25
    $region24: #{ds_hgnn_layer_forward.3} parent=1 // pred_region
      _
    $region25: #{ds_hgnn_layer_forward.3} parent=1 // pred_fallthru
      _
    // Predicated region
    $region26: #{ds_hgnn_layer_forward.3} parent=1 // pred_check
      _
    $region27: #{ds_hgnn_layer_forward.3} parent=1 // pred_check_branch
      %29 = sbr.rel (0) target = $region29
    $region28: #{ds_hgnn_layer_forward.3} parent=1 // pred_region
      _
    $region29: #{ds_hgnn_layer_forward.3} parent=1 // pred_fallthru
      _
    // Predicated region
    $region30: #{ds_hgnn_layer_forward.3} parent=1 // pred_check
      _
    $region31: #{ds_hgnn_layer_forward.3} parent=1 // pred_check_branch
      %31 = sbr.rel (0) target = $region33
    $region32: #{ds_hgnn_layer_forward.3} parent=1 // pred_region
      _
    $region33: #{ds_hgnn_layer_forward.3} parent=1 // pred_fallthru
      _
    // Predicated region
    $region34: #{ds_hgnn_layer_forward.3} parent=1 // pred_check
      _
    $region35: #{ds_hgnn_layer_forward.3} parent=1 // pred_check_branch
      %33 = sbr.rel (0) target = $region37
    $region36: #{ds_hgnn_layer_forward.3} parent=1 // pred_region
      _
    $region37: #{ds_hgnn_layer_forward.3} parent=1 // pred_fallthru
      _
    // Predicated region
    $region38: #{ds_hgnn_layer_forward.3} parent=1 // pred_check
      _
    $region39: #{ds_hgnn_layer_forward.3} parent=1 // pred_check_branch
      %35 = sbr.rel (0) target = $region41
    $region40: #{ds_hgnn_layer_forward.3} parent=1 // pred_region
      _
    $region41: #{ds_hgnn_layer_forward.3} parent=1 // pred_fallthru
      _
    %v36 = vld [vmem:[%s2] sm:$0xff]
    %v37 = vld [vmem:[%s2 + $0x8] sm:$0xff]
    %v38 = vld [vmem:[%s4] sm:$0xff]
    %v39 = vld [vmem:[%s4 + $0x8] sm:$0xff]
    %v40 = vld [vmem:[%s3] sm:$0xff]
    %v41 = vld [vmem:[%s3 + $0x8] sm:$0xff]
    %43 = vset.pattern.permute.xlu0 0
    %44 = vperm.xlu0 %43, %v40
    %v45 = vpop.permute.xlu0 %44
    %48 = vset.pattern.permute.xlu0 0
    %49 = vperm.xlu0 %48, %v41
    %v50 = vpop.permute.xlu0 %49
    %v52 = vld [vmem:[%s5] sm:$0xff]
    %v53 = vld [vmem:[%s5 + $0x8] sm:$0xff]
    %55 = vset.pattern.permute.xlu0 0
    %56 = vperm.xlu0 %55, %v52
    %v57 = vpop.permute.xlu0 %56
    %60 = vset.pattern.permute.xlu0 0
    %61 = vperm.xlu0 %60, %v53
    %v62 = vpop.permute.xlu0 %61
    %v64 = vld [vmem:[%s0] sm:$0xff]
    %v65 = vld [vmem:[%s0 + $0x8] sm:$0xff]
    %s66 = scalar_lea.vmem %s0, 16
    %v67 = vld [vmem:[%s66] sm:$0xff]
    %v68 = vld [vmem:[%s66 + $0x8] sm:$0xff]
    %v69 = vld [vmem:[%s1] sm:$0xff]
    %v70 = vld [vmem:[%s1 + $0x8] sm:$0xff]
    %s71 = scalar_lea.vmem %s1, 16
    %v72 = vld [vmem:[%s71] sm:$0xff]
    %v73 = vld [vmem:[%s71 + $0x8] sm:$0xff]
    %vm74 = vcmask 130048
    %v76 = vsel %vm74, %v36, 0
    %v79 = vsel %vm74, %v37, 0
    %81 = vmatprep.subr.mxu0 0.0
    %82 = vmatpush1.msra.mxu0 %v64
    %83 = vmatprep.subr.mxu0 0.0
    %84 = vmatpush1.msra.mxu0 %v65
    %85 = vmatprep.subr.mxu0 0.0
    %86 = vmatpush1.msra.mxu0 0.0
    %87 = vmatprep.subr.mxu0 0.0
    %88 = vmatpush1.msra.mxu0 0.0
    %89 = vmatprep.subr.mxu0 0.0
    %90 = vmatpush1.msra.mxu0 0.0
    %91 = vmatprep.subr.mxu0 0.0
    %92 = vmatpush1.msra.mxu0 0.0
    %93 = vmatprep.subr.mxu0 0.0
    %94 = vmatpush1.msra.mxu0 0.0
    %95 = vmatprep.subr.mxu0 0.0
    %96 = vmatpush1.msra.mxu0 0.0
    %97 = vmatprep.subr.mxu0 0.0
    %98 = vmatpush1.msra.mxu0 0.0
    %99 = vmatprep.subr.mxu0 0.0
    %100 = vmatpush1.msra.mxu0 0.0
    %101 = vmatprep.subr.mxu0 0.0
    %102 = vmatpush1.msra.mxu0 0.0
    %103 = vmatprep.subr.mxu0 0.0
    %104 = vmatpush1.msra.mxu0 0.0
    %105 = vmatprep.subr.mxu0 0.0
    %106 = vmatpush1.msra.mxu0 0.0
    %107 = vmatprep.subr.mxu0 0.0
    %108 = vmatpush1.msra.mxu0 0.0
    %109 = vmatprep.subr.mxu0 0.0
    %110 = vmatpush1.msra.mxu0 0.0
    %111 = vmatprep.subr.mxu0 0.0
    %112 = vmatpush1.msra.mxu0 0.0
    %113 = vmatprep.subr.mxu0 0.0
    %114 = vmatpush1.msra.mxu0 0.0
    %115 = vmatprep.subr.mxu0 0.0
    %116 = vmatpush1.msra.mxu0 0.0
    %117 = vmatprep.subr.mxu0 0.0
    %118 = vmatpush1.msra.mxu0 0.0
    %119 = vmatprep.subr.mxu0 0.0
    %120 = vmatpush1.msra.mxu0 0.0
    %121 = vmatprep.subr.mxu0 0.0
    %122 = vmatpush1.msra.mxu0 0.0
    %123 = vmatprep.subr.mxu0 0.0
    %124 = vmatpush1.msra.mxu0 0.0
    %125 = vmatprep.subr.mxu0 0.0
    %126 = vmatpush1.msra.mxu0 0.0
    %127 = vmatprep.subr.mxu0 0.0
    %128 = vmatpush1.msra.mxu0 0.0
    %129 = vmatprep.subr.mxu0 0.0
    %130 = vmatpush1.msra.mxu0 0.0
    %131 = vmatprep.subr.mxu0 0.0
    %132 = vmatpush1.msra.mxu0 0.0
    %133 = vmatprep.subr.mxu0 0.0
    %134 = vmatpush1.msra.mxu0 0.0
    %135 = vmatprep.subr.mxu0 0.0
    %136 = vmatpush1.msra.mxu0 0.0
    %137 = vmatprep.subr.mxu0 0.0
    %138 = vmatpush1.msra.mxu0 0.0
    %139 = vmatprep.subr.mxu0 0.0
    %140 = vmatpush1.msra.mxu0 0.0
    %141 = vmatprep.subr.mxu0 0.0
    %142 = vmatpush1.msra.mxu0 0.0
    %143 = vmatprep.subr.mxu0 0.0
    %144 = vmatpush1.msra.mxu0 0.0
    %145 = vmatprep.mubr.f32.mxu0 0.0
    %146 = vmatmul.mubr.f32.gmra.mrb[0].mxu0 %v76
    %v147 = vpop.f32.mrb[0].mxu0
    %v148 = vadd.f32 %v45, %v147
    %v149 = vpop.f32.mrb[0].mxu0
    %150 = vmatprep.mubr.f32.mxu0 0.0
    %151 = vmatmul.mubr.f32.gmra.mrb[0].mxu0 %v79
    %v152 = vpop.f32.mrb[0].mxu0
    %v153 = vadd.f32 %v50, %v152
    %v154 = vpop.f32.mrb[0].mxu0
    %155 = vdwg.mxu0
    %v156 = vmax.f32 %v148, 0.0
    %v157 = vmax.f32 %v153, 0.0
    %v158 = vadd.f32 %v64, %v156
    %v159 = vadd.f32 %v65, %v157
    %160 = vmatprep.subr.mxu0 0.0
    %161 = vmatpush1.msra.mxu0 %v67
    %162 = vmatprep.subr.mxu0 0.0
    %163 = vmatpush1.msra.mxu0 %v68
    %164 = vmatprep.subr.mxu0 0.0
    %165 = vmatpush1.msra.mxu0 0.0
    %166 = vmatprep.subr.mxu0 0.0
    %167 = vmatpush1.msra.mxu0 0.0
    %168 = vmatprep.subr.mxu0 0.0
    %169 = vmatpush1.msra.mxu0 0.0
    %170 = vmatprep.subr.mxu0 0.0
    %171 = vmatpush1.msra.mxu0 0.0
    %172 = vmatprep.subr.mxu0 0.0
    %173 = vmatpush1.msra.mxu0 0.0
    %174 = vmatprep.subr.mxu0 0.0
    %175 = vmatpush1.msra.mxu0 0.0
    %176 = vmatprep.subr.mxu0 0.0
    %177 = vmatpush1.msra.mxu0 0.0
    %178 = vmatprep.subr.mxu0 0.0
    %179 = vmatpush1.msra.mxu0 0.0
    %180 = vmatprep.subr.mxu0 0.0
    %181 = vmatpush1.msra.mxu0 0.0
    %182 = vmatprep.subr.mxu0 0.0
    %183 = vmatpush1.msra.mxu0 0.0
    %184 = vmatprep.subr.mxu0 0.0
    %185 = vmatpush1.msra.mxu0 0.0
    %186 = vmatprep.subr.mxu0 0.0
    %187 = vmatpush1.msra.mxu0 0.0
    %188 = vmatprep.subr.mxu0 0.0
    %189 = vmatpush1.msra.mxu0 0.0
    %190 = vmatprep.subr.mxu0 0.0
    %191 = vmatpush1.msra.mxu0 0.0
    %192 = vmatprep.subr.mxu0 0.0
    %193 = vmatpush1.msra.mxu0 0.0
    %194 = vmatprep.subr.mxu0 0.0
    %195 = vmatpush1.msra.mxu0 0.0
    %196 = vmatprep.subr.mxu0 0.0
    %197 = vmatpush1.msra.mxu0 0.0
    %198 = vmatprep.subr.mxu0 0.0
    %199 = vmatpush1.msra.mxu0 0.0
    %200 = vmatprep.subr.mxu0 0.0
    %201 = vmatpush1.msra.mxu0 0.0
    %202 = vmatprep.subr.mxu0 0.0
    %203 = vmatpush1.msra.mxu0 0.0
    %204 = vmatprep.subr.mxu0 0.0
    %205 = vmatpush1.msra.mxu0 0.0
    %206 = vmatprep.subr.mxu0 0.0
    %207 = vmatpush1.msra.mxu0 0.0
    %208 = vmatprep.subr.mxu0 0.0
    %209 = vmatpush1.msra.mxu0 0.0
    %210 = vmatprep.subr.mxu0 0.0
    %211 = vmatpush1.msra.mxu0 0.0
    %212 = vmatprep.subr.mxu0 0.0
    %213 = vmatpush1.msra.mxu0 0.0
    %214 = vmatprep.subr.mxu0 0.0
    %215 = vmatpush1.msra.mxu0 0.0
    %216 = vmatprep.subr.mxu0 0.0
    %217 = vmatpush1.msra.mxu0 0.0
    %218 = vmatprep.subr.mxu0 0.0
    %219 = vmatpush1.msra.mxu0 0.0
    %220 = vmatprep.subr.mxu0 0.0
    %221 = vmatpush1.msra.mxu0 0.0
    %222 = vmatprep.subr.mxu0 0.0
    %223 = vmatpush1.msra.mxu0 0.0
    %224 = vmatprep.mubr.f32.mxu0 0.0
    %225 = vmatmul.mubr.f32.gmra.mrb[0].mxu0 %v76
    %v226 = vpop.f32.mrb[0].mxu0
    %v227 = vadd.f32 %v45, %v226
    %v228 = vpop.f32.mrb[0].mxu0
    %229 = vmatprep.mubr.f32.mxu0 0.0
    %230 = vmatmul.mubr.f32.gmra.mrb[0].mxu0 %v79
    %v231 = vpop.f32.mrb[0].mxu0
    %v232 = vadd.f32 %v50, %v231
    %v233 = vpop.f32.mrb[0].mxu0
    %234 = vdwg.mxu0
    %v235 = vmax.f32 %v227, 0.0
    %v236 = vmax.f32 %v232, 0.0
    %v237 = vadd.f32 %v67, %v235
    %v238 = vadd.f32 %v68, %v236
    %v240 = vsel %vm74, %v38, 0
    %v243 = vsel %vm74, %v39, 0
    %245 = vmatprep.subr.mxu0 0.0
    %246 = vmatpush1.msra.mxu0 %v69
    %247 = vmatprep.subr.mxu0 0.0
    %248 = vmatpush1.msra.mxu0 %v70
    %249 = vmatprep.subr.mxu0 0.0
    %250 = vmatpush1.msra.mxu0 0.0
    %251 = vmatprep.subr.mxu0 0.0
    %252 = vmatpush1.msra.mxu0 0.0
    %253 = vmatprep.subr.mxu0 0.0
    %254 = vmatpush1.msra.mxu0 0.0
    %255 = vmatprep.subr.mxu0 0.0
    %256 = vmatpush1.msra.mxu0 0.0
    %257 = vmatprep.subr.mxu0 0.0
    %258 = vmatpush1.msra.mxu0 0.0
    %259 = vmatprep.subr.mxu0 0.0
    %260 = vmatpush1.msra.mxu0 0.0
    %261 = vmatprep.subr.mxu0 0.0
    %262 = vmatpush1.msra.mxu0 0.0
    %263 = vmatprep.subr.mxu0 0.0
    %264 = vmatpush1.msra.mxu0 0.0
    %265 = vmatprep.subr.mxu0 0.0
    %266 = vmatpush1.msra.mxu0 0.0
    %267 = vmatprep.subr.mxu0 0.0
    %268 = vmatpush1.msra.mxu0 0.0
    %269 = vmatprep.subr.mxu0 0.0
    %270 = vmatpush1.msra.mxu0 0.0
    %271 = vmatprep.subr.mxu0 0.0
    %272 = vmatpush1.msra.mxu0 0.0
    %273 = vmatprep.subr.mxu0 0.0
    %274 = vmatpush1.msra.mxu0 0.0
    %275 = vmatprep.subr.mxu0 0.0
    %276 = vmatpush1.msra.mxu0 0.0
    %277 = vmatprep.subr.mxu0 0.0
    %278 = vmatpush1.msra.mxu0 0.0
    %279 = vmatprep.subr.mxu0 0.0
    %280 = vmatpush1.msra.mxu0 0.0
    %281 = vmatprep.subr.mxu0 0.0
    %282 = vmatpush1.msra.mxu0 0.0
    %283 = vmatprep.subr.mxu0 0.0
    %284 = vmatpush1.msra.mxu0 0.0
    %285 = vmatprep.subr.mxu0 0.0
    %286 = vmatpush1.msra.mxu0 0.0
    %287 = vmatprep.subr.mxu0 0.0
    %288 = vmatpush1.msra.mxu0 0.0
    %289 = vmatprep.subr.mxu0 0.0
    %290 = vmatpush1.msra.mxu0 0.0
    %291 = vmatprep.subr.mxu0 0.0
    %292 = vmatpush1.msra.mxu0 0.0
    %293 = vmatprep.subr.mxu0 0.0
    %294 = vmatpush1.msra.mxu0 0.0
    %295 = vmatprep.subr.mxu0 0.0
    %296 = vmatpush1.msra.mxu0 0.0
    %297 = vmatprep.subr.mxu0 0.0
    %298 = vmatpush1.msra.mxu0 0.0
    %299 = vmatprep.subr.mxu0 0.0
    %300 = vmatpush1.msra.mxu0 0.0
    %301 = vmatprep.subr.mxu0 0.0
    %302 = vmatpush1.msra.mxu0 0.0
    %303 = vmatprep.subr.mxu0 0.0
    %304 = vmatpush1.msra.mxu0 0.0
    %305 = vmatprep.subr.mxu0 0.0
    %306 = vmatpush1.msra.mxu0 0.0
    %307 = vmatprep.subr.mxu0 0.0
    %308 = vmatpush1.msra.mxu0 0.0
    %309 = vmatprep.mubr.f32.mxu0 0.0
    %310 = vmatmul.mubr.f32.gmra.mrb[0].mxu0 %v240
    %v311 = vpop.f32.mrb[0].mxu0
    %v312 = vadd.f32 %v57, %v311
    %v313 = vpop.f32.mrb[0].mxu0
    %314 = vmatprep.mubr.f32.mxu0 0.0
    %315 = vmatmul.mubr.f32.gmra.mrb[0].mxu0 %v243
    %v316 = vpop.f32.mrb[0].mxu0
    %v317 = vadd.f32 %v62, %v316
    %v318 = vpop.f32.mrb[0].mxu0
    %319 = vdwg.mxu0
    %v320 = vmax.f32 %v312, 0.0
    %v321 = vmax.f32 %v317, 0.0
    %v322 = vadd.f32 %v69, %v320
    %v323 = vadd.f32 %v70, %v321
    %324 = vmatprep.subr.mxu0 0.0
    %325 = vmatpush1.msra.mxu0 %v72
    %326 = vmatprep.subr.mxu0 0.0
    %327 = vmatpush1.msra.mxu0 %v73
    %328 = vmatprep.subr.mxu0 0.0
    %329 = vmatpush1.msra.mxu0 0.0
    %330 = vmatprep.subr.mxu0 0.0
    %331 = vmatpush1.msra.mxu0 0.0
    %332 = vmatprep.subr.mxu0 0.0
    %333 = vmatpush1.msra.mxu0 0.0
    %334 = vmatprep.subr.mxu0 0.0
    %335 = vmatpush1.msra.mxu0 0.0
    %336 = vmatprep.subr.mxu0 0.0
    %337 = vmatpush1.msra.mxu0 0.0
    %338 = vmatprep.subr.mxu0 0.0
    %339 = vmatpush1.msra.mxu0 0.0
    %340 = vmatprep.subr.mxu0 0.0
    %341 = vmatpush1.msra.mxu0 0.0
    %342 = vmatprep.subr.mxu0 0.0
    %343 = vmatpush1.msra.mxu0 0.0
    %344 = vmatprep.subr.mxu0 0.0
    %345 = vmatpush1.msra.mxu0 0.0
    %346 = vmatprep.subr.mxu0 0.0
    %347 = vmatpush1.msra.mxu0 0.0
    %348 = vmatprep.subr.mxu0 0.0
    %349 = vmatpush1.msra.mxu0 0.0
    %350 = vmatprep.subr.mxu0 0.0
    %351 = vmatpush1.msra.mxu0 0.0
    %352 = vmatprep.subr.mxu0 0.0
    %353 = vmatpush1.msra.mxu0 0.0
    %354 = vmatprep.subr.mxu0 0.0
    %355 = vmatpush1.msra.mxu0 0.0
    %356 = vmatprep.subr.mxu0 0.0
    %357 = vmatpush1.msra.mxu0 0.0
    %358 = vmatprep.subr.mxu0 0.0
    %359 = vmatpush1.msra.mxu0 0.0
    %360 = vmatprep.subr.mxu0 0.0
    %361 = vmatpush1.msra.mxu0 0.0
    %362 = vmatprep.subr.mxu0 0.0
    %363 = vmatpush1.msra.mxu0 0.0
    %364 = vmatprep.subr.mxu0 0.0
    %365 = vmatpush1.msra.mxu0 0.0
    %366 = vmatprep.subr.mxu0 0.0
    %367 = vmatpush1.msra.mxu0 0.0
    %368 = vmatprep.subr.mxu0 0.0
    %369 = vmatpush1.msra.mxu0 0.0
    %370 = vmatprep.subr.mxu0 0.0
    %371 = vmatpush1.msra.mxu0 0.0
    %372 = vmatprep.subr.mxu0 0.0
    %373 = vmatpush1.msra.mxu0 0.0
    %374 = vmatprep.subr.mxu0 0.0
    %375 = vmatpush1.msra.mxu0 0.0
    %376 = vmatprep.subr.mxu0 0.0
    %377 = vmatpush1.msra.mxu0 0.0
    %378 = vmatprep.subr.mxu0 0.0
    %379 = vmatpush1.msra.mxu0 0.0
    %380 = vmatprep.subr.mxu0 0.0
    %381 = vmatpush1.msra.mxu0 0.0
    %382 = vmatprep.subr.mxu0 0.0
    %383 = vmatpush1.msra.mxu0 0.0
    %384 = vmatprep.subr.mxu0 0.0
    %385 = vmatpush1.msra.mxu0 0.0
    %386 = vmatprep.subr.mxu0 0.0
    %387 = vmatpush1.msra.mxu0 0.0
    %388 = vmatprep.mubr.f32.mxu0 0.0
    %389 = vmatmul.mubr.f32.gmra.mrb[0].mxu0 %v240
    %v390 = vpop.f32.mrb[0].mxu0
    %v391 = vadd.f32 %v57, %v390
    %v392 = vpop.f32.mrb[0].mxu0
    %393 = vmatprep.mubr.f32.mxu0 0.0
    %394 = vmatmul.mubr.f32.gmra.mrb[0].mxu0 %v243
    %v395 = vpop.f32.mrb[0].mxu0
    %v396 = vadd.f32 %v62, %v395
    %v397 = vpop.f32.mrb[0].mxu0
    %398 = vdwg.mxu0
    %v399 = vmax.f32 %v391, 0.0
    %v400 = vmax.f32 %v396, 0.0
    %v401 = vadd.f32 %v72, %v399
    %v402 = vadd.f32 %v73, %v400
    %vm403 = vcmask 523264
    %v404 = vsel %vm403, %v158, 0.0
    %v405 = vsel %vm403, %v159, 0.0
    %v406 = vadd.f32 %v404, %v405
    %v407 = vrot.slane %v406, 4
    %v408 = vadd.f32 %v406, %v407
    %v409 = vrot.slane %v408, 2
    %v410 = vadd.f32 %v408, %v409
    %v411 = vrot.slane %v410, 1
    %v412 = vadd.f32 %v410, %v411
    %v413 = vsel %vm403, %v237, 0.0
    %v414 = vsel %vm403, %v238, 0.0
    %v415 = vadd.f32 %v413, %v414
    %v416 = vrot.slane %v415, 4
    %v417 = vadd.f32 %v415, %v416
    %v418 = vrot.slane %v417, 2
    %v419 = vadd.f32 %v417, %v418
    %v420 = vrot.slane %v419, 1
    %v421 = vadd.f32 %v419, %v420
    %v422 = vadd.f32 %v412, %v421
    %v423 = vmul.f32 %v422, 0.03125
    %v424 = vsub.f32 %v158, %v423
    %v425 = vsub.f32 %v159, %v423
    %v426 = vsub.f32 %v237, %v423
    %v427 = vsub.f32 %v238, %v423
    %v428 = vmul.f32 %v424, %v424
    %v429 = vmul.f32 %v425, %v425
    %v430 = vsel %vm403, %v428, 0.0
    %v431 = vsel %vm403, %v429, 0.0
    %v432 = vadd.f32 %v430, %v431
    %v433 = vrot.slane %v432, 4
    %v434 = vadd.f32 %v432, %v433
    %v435 = vrot.slane %v434, 2
    %v436 = vadd.f32 %v434, %v435
    %v437 = vrot.slane %v436, 1
    %v438 = vadd.f32 %v436, %v437
    %v439 = vmul.f32 %v426, %v426
    %v440 = vmul.f32 %v427, %v427
    %v441 = vsel %vm403, %v439, 0.0
    %v442 = vsel %vm403, %v440, 0.0
    %v443 = vadd.f32 %v441, %v442
    %v444 = vrot.slane %v443, 4
    %v445 = vadd.f32 %v443, %v444
    %v446 = vrot.slane %v445, 2
    %v447 = vadd.f32 %v445, %v446
    %v448 = vrot.slane %v447, 1
    %v449 = vadd.f32 %v447, %v448
    %v450 = vadd.f32 %v438, %v449
    %v451 = vmul.f32 %v450, 0.03125
    %v452 = vadd.f32 %v451, 1e-05
    %v453 = vrsqrt.pop %v452
    %v454 = vmul.f32 %v424, %v453
    %v455 = vmul.f32 %v425, %v453
    %v456 = vmul.f32 %v426, %v453
    %v457 = vmul.f32 %v427, %v453
    %vm458 = vcmask 556032
    %v459 = vsel %vm458, %v322, 0.0
    %v460 = vsel %vm458, %v323, 0.0
    %v461 = vadd.f32 %v459, %v460
    %v462 = vrot.slane %v461, 4
    %v463 = vadd.f32 %v461, %v462
    %v464 = vrot.slane %v463, 2
    %v465 = vadd.f32 %v463, %v464
    %v466 = vrot.slane %v465, 1
    %v467 = vadd.f32 %v465, %v466
    %v468 = vsel %vm458, %v401, 0.0
    %v469 = vsel %vm458, %v402, 0.0
    %v470 = vadd.f32 %v468, %v469
    %v471 = vrot.slane %v470, 4
    %v472 = vadd.f32 %v470, %v471
    %v473 = vrot.slane %v472, 2
    %v474 = vadd.f32 %v472, %v473
    %v475 = vrot.slane %v474, 1
    %v476 = vadd.f32 %v474, %v475
    %v477 = vadd.f32 %v467, %v476
    %v478 = vmul.f32 %v477, 0.03125
    %v479 = vsub.f32 %v322, %v478
    %v480 = vsub.f32 %v323, %v478
    %v481 = vsub.f32 %v401, %v478
    %v482 = vsub.f32 %v402, %v478
    %v483 = vmul.f32 %v479, %v479
    %v484 = vmul.f32 %v480, %v480
    %v485 = vsel %vm458, %v483, 0.0
    %v486 = vsel %vm458, %v484, 0.0
    %v487 = vadd.f32 %v485, %v486
    %v488 = vrot.slane %v487, 4
    %v489 = vadd.f32 %v487, %v488
    %v490 = vrot.slane %v489, 2
    %v491 = vadd.f32 %v489, %v490
    %v492 = vrot.slane %v491, 1
    %v493 = vadd.f32 %v491, %v492
    %v494 = vmul.f32 %v481, %v481
    %v495 = vmul.f32 %v482, %v482
    %v496 = vsel %vm458, %v494, 0.0
    %v497 = vsel %vm458, %v495, 0.0
    %v498 = vadd.f32 %v496, %v497
    %v499 = vrot.slane %v498, 4
    %v500 = vadd.f32 %v498, %v499
    %v501 = vrot.slane %v500, 2
    %v502 = vadd.f32 %v500, %v501
    %v503 = vrot.slane %v502, 1
    %v504 = vadd.f32 %v502, %v503
    %v505 = vadd.f32 %v493, %v504
    %v506 = vmul.f32 %v505, 0.03125
    %v507 = vadd.f32 %v506, 1e-05
    %v508 = vrsqrt.pop %v507
    %v509 = vmul.f32 %v479, %v508
    %v510 = vmul.f32 %v480, %v508
    %v511 = vmul.f32 %v481, %v508
    %v512 = vmul.f32 %v482, %v508
    %v513 = vld [vmem:[%s6] sm:$0xff]
    %v514 = vld [vmem:[%s6 + $0x8] sm:$0xff]
    %v515 = vld [vmem:[%s6 + $0x10] sm:$0xff]
    %v516 = vld [vmem:[%s6 + $0x18] sm:$0xff]
    %v517 = vld [vmem:[%s6 + $0x20] sm:$0xff]
    %v518 = vld [vmem:[%s6 + $0x28] sm:$0xff]
    %v519 = vld [vmem:[%s6 + $0x30] sm:$0xff]
    %v520 = vld [vmem:[%s6 + $0x38] sm:$0xff]
    %v521 = vld [vmem:[%s7] sm:$0xff]
    %v522 = vld [vmem:[%s7 + $0x8] sm:$0xff]
    %v523 = vld [vmem:[%s7 + $0x10] sm:$0xff]
    %v524 = vld [vmem:[%s7 + $0x18] sm:$0xff]
    %v525 = vld [vmem:[%s7 + $0x20] sm:$0xff]
    %v526 = vld [vmem:[%s7 + $0x28] sm:$0xff]
    %v527 = vld [vmem:[%s7 + $0x30] sm:$0xff]
    %v528 = vld [vmem:[%s7 + $0x38] sm:$0xff]
    %v529 = vld [vmem:[%s7 + $0x40] sm:$0xf]
    %v531 = vsel %vm458, %v509, 0
    %v534 = vsel %vm458, %v510, 0
    %vm536 = vcmask 1043456
    %v538 = vsel %vm536, %v529, 0
    %540 = vmatprep.subr.mxu0 0.0
    %541 = vmatpush1.msra.mxu0 %v521
    %542 = vmatprep.subr.mxu0 0.0
    %543 = vmatpush1.msra.mxu0 %v522
    %544 = vmatprep.subr.mxu0 0.0
    %545 = vmatpush1.msra.mxu0 %v523
    %546 = vmatprep.subr.mxu0 0.0
    %547 = vmatpush1.msra.mxu0 %v524
    %548 = vmatprep.subr.mxu0 0.0
    %549 = vmatpush1.msra.mxu0 %v525
    %550 = vmatprep.subr.mxu0 0.0
    %551 = vmatpush1.msra.mxu0 %v526
    %552 = vmatprep.subr.mxu0 0.0
    %553 = vmatpush1.msra.mxu0 %v527
    %554 = vmatprep.subr.mxu0 0.0
    %555 = vmatpush1.msra.mxu0 %v528
    %556 = vmatprep.subr.mxu0 0.0
    %557 = vmatpush1.msra.mxu0 %v538
    %558 = vmatprep.subr.mxu0 0.0
    %559 = vmatpush1.msra.mxu0 0.0
    %560 = vmatprep.subr.mxu0 0.0
    %561 = vmatpush1.msra.mxu0 0.0
    %562 = vmatprep.subr.mxu0 0.0
    %563 = vmatpush1.msra.mxu0 0.0
    %564 = vmatprep.subr.mxu0 0.0
    %565 = vmatpush1.msra.mxu0 0.0
    %566 = vmatprep.subr.mxu0 0.0
    %567 = vmatpush1.msra.mxu0 0.0
    %568 = vmatprep.subr.mxu0 0.0
    %569 = vmatpush1.msra.mxu0 0.0
    %570 = vmatprep.subr.mxu0 0.0
    %571 = vmatpush1.msra.mxu0 0.0
    %572 = vmatprep.subr.mxu0 0.0
    %573 = vmatpush1.msra.mxu0 0.0
    %574 = vmatprep.subr.mxu0 0.0
    %575 = vmatpush1.msra.mxu0 0.0
    %576 = vmatprep.subr.mxu0 0.0
    %577 = vmatpush1.msra.mxu0 0.0
    %578 = vmatprep.subr.mxu0 0.0
    %579 = vmatpush1.msra.mxu0 0.0
    %580 = vmatprep.subr.mxu0 0.0
    %581 = vmatpush1.msra.mxu0 0.0
    %582 = vmatprep.subr.mxu0 0.0
    %583 = vmatpush1.msra.mxu0 0.0
    %584 = vmatprep.subr.mxu0 0.0
    %585 = vmatpush1.msra.mxu0 0.0
    %586 = vmatprep.subr.mxu0 0.0
    %587 = vmatpush1.msra.mxu0 0.0
    %588 = vmatprep.subr.mxu0 0.0
    %589 = vmatpush1.msra.mxu0 0.0
    %590 = vmatprep.subr.mxu0 0.0
    %591 = vmatpush1.msra.mxu0 0.0
    %592 = vmatprep.subr.mxu0 0.0
    %593 = vmatpush1.msra.mxu0 0.0
    %594 = vmatprep.subr.mxu0 0.0
    %595 = vmatpush1.msra.mxu0 0.0
    %596 = vmatprep.subr.mxu0 0.0
    %597 = vmatpush1.msra.mxu0 0.0
    %598 = vmatprep.subr.mxu0 0.0
    %599 = vmatpush1.msra.mxu0 0.0
    %600 = vmatprep.subr.mxu0 0.0
    %601 = vmatpush1.msra.mxu0 0.0
    %602 = vmatprep.subr.mxu0 0.0
    %603 = vmatpush1.msra.mxu0 0.0
    %604 = vmatprep.mubr.f32.mxu0 0.0
    %605 = vmatmul.mubr.f32.gmra.mrb[0].mxu0 %v531
    %v606 = vpop.f32.mrb[0].mxu0
    %v607 = vadd.f32 0.0, %v606
    %v608 = vpop.f32.mrb[0].mxu0
    %609 = vmatprep.mubr.f32.mxu0 0.0
    %610 = vmatmul.mubr.f32.gmra.mrb[0].mxu0 %v534
    %v611 = vpop.f32.mrb[0].mxu0
    %v612 = vadd.f32 0.0, %v611
    %v613 = vpop.f32.mrb[0].mxu0
    %614 = vdwg.mxu0
    %v616 = vsel %vm403, %v454, 0
    %v619 = vsel %vm403, %v455, 0
    %621 = vmatprep.subr.mxu0 0.0
    %622 = vmatpush1.msra.mxu0 %v513
    %623 = vmatprep.subr.mxu0 0.0
    %624 = vmatpush1.msra.mxu0 %v514
    %625 = vmatprep.subr.mxu0 0.0
    %626 = vmatpush1.msra.mxu0 %v515
    %627 = vmatprep.subr.mxu0 0.0
    %628 = vmatpush1.msra.mxu0 %v516
    %629 = vmatprep.subr.mxu0 0.0
    %630 = vmatpush1.msra.mxu0 %v517
    %631 = vmatprep.subr.mxu0 0.0
    %632 = vmatpush1.msra.mxu0 %v518
    %633 = vmatprep.subr.mxu0 0.0
    %634 = vmatpush1.msra.mxu0 %v519
    %635 = vmatprep.subr.mxu0 0.0
    %636 = vmatpush1.msra.mxu0 %v520
    %637 = vmatprep.subr.mxu0 0.0
    %638 = vmatpush1.msra.mxu0 0.0
    %639 = vmatprep.subr.mxu0 0.0
    %640 = vmatpush1.msra.mxu0 0.0
    %641 = vmatprep.subr.mxu0 0.0
    %642 = vmatpush1.msra.mxu0 0.0
    %643 = vmatprep.subr.mxu0 0.0
    %644 = vmatpush1.msra.mxu0 0.0
    %645 = vmatprep.subr.mxu0 0.0
    %646 = vmatpush1.msra.mxu0 0.0
    %647 = vmatprep.subr.mxu0 0.0
    %648 = vmatpush1.msra.mxu0 0.0
    %649 = vmatprep.subr.mxu0 0.0
    %650 = vmatpush1.msra.mxu0 0.0
    %651 = vmatprep.subr.mxu0 0.0
    %652 = vmatpush1.msra.mxu0 0.0
    %653 = vmatprep.subr.mxu0 0.0
    %654 = vmatpush1.msra.mxu0 0.0
    %655 = vmatprep.subr.mxu0 0.0
    %656 = vmatpush1.msra.mxu0 0.0
    %657 = vmatprep.subr.mxu0 0.0
    %658 = vmatpush1.msra.mxu0 0.0
    %659 = vmatprep.subr.mxu0 0.0
    %660 = vmatpush1.msra.mxu0 0.0
    %661 = vmatprep.subr.mxu0 0.0
    %662 = vmatpush1.msra.mxu0 0.0
    %663 = vmatprep.subr.mxu0 0.0
    %664 = vmatpush1.msra.mxu0 0.0
    %665 = vmatprep.subr.mxu0 0.0
    %666 = vmatpush1.msra.mxu0 0.0
    %667 = vmatprep.subr.mxu0 0.0
    %668 = vmatpush1.msra.mxu0 0.0
    %669 = vmatprep.subr.mxu0 0.0
    %670 = vmatpush1.msra.mxu0 0.0
    %671 = vmatprep.subr.mxu0 0.0
    %672 = vmatpush1.msra.mxu0 0.0
    %673 = vmatprep.subr.mxu0 0.0
    %674 = vmatpush1.msra.mxu0 0.0
    %675 = vmatprep.subr.mxu0 0.0
    %676 = vmatpush1.msra.mxu0 0.0
    %677 = vmatprep.subr.mxu0 0.0
    %678 = vmatpush1.msra.mxu0 0.0
    %679 = vmatprep.subr.mxu0 0.0
    %680 = vmatpush1.msra.mxu0 0.0
    %681 = vmatprep.subr.mxu0 0.0
    %682 = vmatpush1.msra.mxu0 0.0
    %683 = vmatprep.subr.mxu0 0.0
    %684 = vmatpush1.msra.mxu0 0.0
    %685 = vmatprep.mubr.f32.mxu0 0.0
    %686 = vmatmul.mubr.f32.gmra.mrb[0].mxu0 %v616
    %v687 = vpop.f32.mrb[0].mxu0
    %v688 = vadd.f32 %v607, %v687
    %v689 = vpop.f32.mrb[0].mxu0
    %690 = vmatprep.mubr.f32.mxu0 0.0
    %691 = vmatmul.mubr.f32.gmra.mrb[0].mxu0 %v619
    %v692 = vpop.f32.mrb[0].mxu0
    %v693 = vadd.f32 %v612, %v692
    %v694 = vpop.f32.mrb[0].mxu0
    %695 = vdwg.mxu0
    %s696 = scalar_lea.vmem %s6, 64
    %v697 = vld [vmem:[%s696] sm:$0xff]
    %v698 = vld [vmem:[%s696 + $0x8] sm:$0xff]
    %v699 = vld [vmem:[%s696 + $0x10] sm:$0xff]
    %v700 = vld [vmem:[%s696 + $0x18] sm:$0xff]
    %v701 = vld [vmem:[%s696 + $0x20] sm:$0xff]
    %v702 = vld [vmem:[%s696 + $0x28] sm:$0xff]
    %v703 = vld [vmem:[%s696 + $0x30] sm:$0xff]
    %v704 = vld [vmem:[%s696 + $0x38] sm:$0xff]
    %s705 = scalar_lea.vmem %s7, 72
    %v706 = vld [vmem:[%s705] sm:$0xff]
    %v707 = vld [vmem:[%s705 + $0x8] sm:$0xff]
    %v708 = vld [vmem:[%s705 + $0x10] sm:$0xff]
    %v709 = vld [vmem:[%s705 + $0x18] sm:$0xff]
    %v710 = vld [vmem:[%s705 + $0x20] sm:$0xff]
    %v711 = vld [vmem:[%s705 + $0x28] sm:$0xff]
    %v712 = vld [vmem:[%s705 + $0x30] sm:$0xff]
    %v713 = vld [vmem:[%s705 + $0x38] sm:$0xff]
    %v714 = vld [vmem:[%s705 + $0x40] sm:$0xf]
    %v716 = vsel %vm458, %v511, 0
    %v719 = vsel %vm458, %v512, 0
    %v722 = vsel %vm536, %v714, 0
    %724 = vmatprep.subr.mxu0 0.0
    %725 = vmatpush1.msra.mxu0 %v706
    %726 = vmatprep.subr.mxu0 0.0
    %727 = vmatpush1.msra.mxu0 %v707
    %728 = vmatprep.subr.mxu0 0.0
    %729 = vmatpush1.msra.mxu0 %v708
    %730 = vmatprep.subr.mxu0 0.0
    %731 = vmatpush1.msra.mxu0 %v709
    %732 = vmatprep.subr.mxu0 0.0
    %733 = vmatpush1.msra.mxu0 %v710
    %734 = vmatprep.subr.mxu0 0.0
    %735 = vmatpush1.msra.mxu0 %v711
    %736 = vmatprep.subr.mxu0 0.0
    %737 = vmatpush1.msra.mxu0 %v712
    %738 = vmatprep.subr.mxu0 0.0
    %739 = vmatpush1.msra.mxu0 %v713
    %740 = vmatprep.subr.mxu0 0.0
    %741 = vmatpush1.msra.mxu0 %v722
    %742 = vmatprep.subr.mxu0 0.0
    %743 = vmatpush1.msra.mxu0 0.0
    %744 = vmatprep.subr.mxu0 0.0
    %745 = vmatpush1.msra.mxu0 0.0
    %746 = vmatprep.subr.mxu0 0.0
    %747 = vmatpush1.msra.mxu0 0.0
    %748 = vmatprep.subr.mxu0 0.0
    %749 = vmatpush1.msra.mxu0 0.0
    %750 = vmatprep.subr.mxu0 0.0
    %751 = vmatpush1.msra.mxu0 0.0
    %752 = vmatprep.subr.mxu0 0.0
    %753 = vmatpush1.msra.mxu0 0.0
    %754 = vmatprep.subr.mxu0 0.0
    %755 = vmatpush1.msra.mxu0 0.0
    %756 = vmatprep.subr.mxu0 0.0
    %757 = vmatpush1.msra.mxu0 0.0
    %758 = vmatprep.subr.mxu0 0.0
    %759 = vmatpush1.msra.mxu0 0.0
    %760 = vmatprep.subr.mxu0 0.0
    %761 = vmatpush1.msra.mxu0 0.0
    %762 = vmatprep.subr.mxu0 0.0
    %763 = vmatpush1.msra.mxu0 0.0
    %764 = vmatprep.subr.mxu0 0.0
    %765 = vmatpush1.msra.mxu0 0.0
    %766 = vmatprep.subr.mxu0 0.0
    %767 = vmatpush1.msra.mxu0 0.0
    %768 = vmatprep.subr.mxu0 0.0
    %769 = vmatpush1.msra.mxu0 0.0
    %770 = vmatprep.subr.mxu0 0.0
    %771 = vmatpush1.msra.mxu0 0.0
    %772 = vmatprep.subr.mxu0 0.0
    %773 = vmatpush1.msra.mxu0 0.0
    %774 = vmatprep.subr.mxu0 0.0
    %775 = vmatpush1.msra.mxu0 0.0
    %776 = vmatprep.subr.mxu0 0.0
    %777 = vmatpush1.msra.mxu0 0.0
    %778 = vmatprep.subr.mxu0 0.0
    %779 = vmatpush1.msra.mxu0 0.0
    %780 = vmatprep.subr.mxu0 0.0
    %781 = vmatpush1.msra.mxu0 0.0
    %782 = vmatprep.subr.mxu0 0.0
    %783 = vmatpush1.msra.mxu0 0.0
    %784 = vmatprep.subr.mxu0 0.0
    %785 = vmatpush1.msra.mxu0 0.0
    %786 = vmatprep.subr.mxu0 0.0
    %787 = vmatpush1.msra.mxu0 0.0
    %788 = vmatprep.mubr.f32.mxu0 0.0
    %789 = vmatmul.mubr.f32.gmra.mrb[0].mxu0 %v716
    %v790 = vpop.f32.mrb[0].mxu0
    %v791 = vadd.f32 0.0, %v790
    %v792 = vpop.f32.mrb[0].mxu0
    %793 = vmatprep.mubr.f32.mxu0 0.0
    %794 = vmatmul.mubr.f32.gmra.mrb[0].mxu0 %v719
    %v795 = vpop.f32.mrb[0].mxu0
    %v796 = vadd.f32 0.0, %v795
    %v797 = vpop.f32.mrb[0].mxu0
    %798 = vdwg.mxu0
    %v800 = vsel %vm403, %v456, 0
    %v803 = vsel %vm403, %v457, 0
    %805 = vmatprep.subr.mxu0 0.0
    %806 = vmatpush1.msra.mxu0 %v697
    %807 = vmatprep.subr.mxu0 0.0
    %808 = vmatpush1.msra.mxu0 %v698
    %809 = vmatprep.subr.mxu0 0.0
    %810 = vmatpush1.msra.mxu0 %v699
    %811 = vmatprep.subr.mxu0 0.0
    %812 = vmatpush1.msra.mxu0 %v700
    %813 = vmatprep.subr.mxu0 0.0
    %814 = vmatpush1.msra.mxu0 %v701
    %815 = vmatprep.subr.mxu0 0.0
    %816 = vmatpush1.msra.mxu0 %v702
    %817 = vmatprep.subr.mxu0 0.0
    %818 = vmatpush1.msra.mxu0 %v703
    %819 = vmatprep.subr.mxu0 0.0
    %820 = vmatpush1.msra.mxu0 %v704
    %821 = vmatprep.subr.mxu0 0.0
    %822 = vmatpush1.msra.mxu0 0.0
    %823 = vmatprep.subr.mxu0 0.0
    %824 = vmatpush1.msra.mxu0 0.0
    %825 = vmatprep.subr.mxu0 0.0
    %826 = vmatpush1.msra.mxu0 0.0
    %827 = vmatprep.subr.mxu0 0.0
    %828 = vmatpush1.msra.mxu0 0.0
    %829 = vmatprep.subr.mxu0 0.0
    %830 = vmatpush1.msra.mxu0 0.0
    %831 = vmatprep.subr.mxu0 0.0
    %832 = vmatpush1.msra.mxu0 0.0
    %833 = vmatprep.subr.mxu0 0.0
    %834 = vmatpush1.msra.mxu0 0.0
    %835 = vmatprep.subr.mxu0 0.0
    %836 = vmatpush1.msra.mxu0 0.0
    %837 = vmatprep.subr.mxu0 0.0
    %838 = vmatpush1.msra.mxu0 0.0
    %839 = vmatprep.subr.mxu0 0.0
    %840 = vmatpush1.msra.mxu0 0.0
    %841 = vmatprep.subr.mxu0 0.0
    %842 = vmatpush1.msra.mxu0 0.0
    %843 = vmatprep.subr.mxu0 0.0
    %844 = vmatpush1.msra.mxu0 0.0
    %845 = vmatprep.subr.mxu0 0.0
    %846 = vmatpush1.msra.mxu0 0.0
    %847 = vmatprep.subr.mxu0 0.0
    %848 = vmatpush1.msra.mxu0 0.0
    %849 = vmatprep.subr.mxu0 0.0
    %850 = vmatpush1.msra.mxu0 0.0
    %851 = vmatprep.subr.mxu0 0.0
    %852 = vmatpush1.msra.mxu0 0.0
    %853 = vmatprep.subr.mxu0 0.0
    %854 = vmatpush1.msra.mxu0 0.0
    %855 = vmatprep.subr.mxu0 0.0
    %856 = vmatpush1.msra.mxu0 0.0
    %857 = vmatprep.subr.mxu0 0.0
    %858 = vmatpush1.msra.mxu0 0.0
    %859 = vmatprep.subr.mxu0 0.0
    %860 = vmatpush1.msra.mxu0 0.0
    %861 = vmatprep.subr.mxu0 0.0
    %862 = vmatpush1.msra.mxu0 0.0
    %863 = vmatprep.subr.mxu0 0.0
    %864 = vmatpush1.msra.mxu0 0.0
    %865 = vmatprep.subr.mxu0 0.0
    %866 = vmatpush1.msra.mxu0 0.0
    %867 = vmatprep.subr.mxu0 0.0
    %868 = vmatpush1.msra.mxu0 0.0
    %869 = vmatprep.mubr.f32.mxu0 0.0
    %870 = vmatmul.mubr.f32.gmra.mrb[0].mxu0 %v800
    %v871 = vpop.f32.mrb[0].mxu0
    %v872 = vadd.f32 %v791, %v871
    %v873 = vpop.f32.mrb[0].mxu0
    %874 = vmatprep.mubr.f32.mxu0 0.0
    %875 = vmatmul.mubr.f32.gmra.mrb[0].mxu0 %v803
    %v876 = vpop.f32.mrb[0].mxu0
    %v877 = vadd.f32 %v796, %v876
    %v878 = vpop.f32.mrb[0].mxu0
    %879 = vdwg.mxu0
    %v880 = vld [vmem:[%s8] sm:$0xff]
    %v881 = vld [vmem:[%s8 + $0x8] sm:$0xff]
    %v882 = vld [vmem:[%s8 + $0x10] sm:$0xff]
    %v883 = vld [vmem:[%s8 + $0x18] sm:$0xff]
    %v884 = vld [vmem:[%s8 + $0x20] sm:$0xff]
    %v885 = vld [vmem:[%s8 + $0x28] sm:$0xff]
    %v886 = vld [vmem:[%s8 + $0x30] sm:$0xff]
    %v887 = vld [vmem:[%s8 + $0x38] sm:$0xff]
    %v888 = vld [vmem:[%s9] sm:$0xff]
    %v889 = vld [vmem:[%s9 + $0x8] sm:$0xff]
    %v890 = vld [vmem:[%s9 + $0x10] sm:$0xff]
    %v891 = vld [vmem:[%s9 + $0x18] sm:$0xff]
    %v892 = vld [vmem:[%s9 + $0x20] sm:$0xff]
    %v893 = vld [vmem:[%s9 + $0x28] sm:$0xff]
    %v894 = vld [vmem:[%s9 + $0x30] sm:$0xff]
    %v895 = vld [vmem:[%s9 + $0x38] sm:$0xff]
    %v896 = vld [vmem:[%s9 + $0x40] sm:$0xf]
    %v898 = vsel %vm536, %v896, 0
    %900 = vmatprep.subr.mxu0 0.0
    %901 = vmatpush1.msra.mxu0 %v888
    %902 = vmatprep.subr.mxu0 0.0
    %903 = vmatpush1.msra.mxu0 %v889
    %904 = vmatprep.subr.mxu0 0.0
    %905 = vmatpush1.msra.mxu0 %v890
    %906 = vmatprep.subr.mxu0 0.0
    %907 = vmatpush1.msra.mxu0 %v891
    %908 = vmatprep.subr.mxu0 0.0
    %909 = vmatpush1.msra.mxu0 %v892
    %910 = vmatprep.subr.mxu0 0.0
    %911 = vmatpush1.msra.mxu0 %v893
    %912 = vmatprep.subr.mxu0 0.0
    %913 = vmatpush1.msra.mxu0 %v894
    %914 = vmatprep.subr.mxu0 0.0
    %915 = vmatpush1.msra.mxu0 %v895
    %916 = vmatprep.subr.mxu0 0.0
    %917 = vmatpush1.msra.mxu0 %v898
    %918 = vmatprep.subr.mxu0 0.0
    %919 = vmatpush1.msra.mxu0 0.0
    %920 = vmatprep.subr.mxu0 0.0
    %921 = vmatpush1.msra.mxu0 0.0
    %922 = vmatprep.subr.mxu0 0.0
    %923 = vmatpush1.msra.mxu0 0.0
    %924 = vmatprep.subr.mxu0 0.0
    %925 = vmatpush1.msra.mxu0 0.0
    %926 = vmatprep.subr.mxu0 0.0
    %927 = vmatpush1.msra.mxu0 0.0
    %928 = vmatprep.subr.mxu0 0.0
    %929 = vmatpush1.msra.mxu0 0.0
    %930 = vmatprep.subr.mxu0 0.0
    %931 = vmatpush1.msra.mxu0 0.0
    %932 = vmatprep.subr.mxu0 0.0
    %933 = vmatpush1.msra.mxu0 0.0
    %934 = vmatprep.subr.mxu0 0.0
    %935 = vmatpush1.msra.mxu0 0.0
    %936 = vmatprep.subr.mxu0 0.0
    %937 = vmatpush1.msra.mxu0 0.0
    %938 = vmatprep.subr.mxu0 0.0
    %939 = vmatpush1.msra.mxu0 0.0
    %940 = vmatprep.subr.mxu0 0.0
    %941 = vmatpush1.msra.mxu0 0.0
    %942 = vmatprep.subr.mxu0 0.0
    %943 = vmatpush1.msra.mxu0 0.0
    %944 = vmatprep.subr.mxu0 0.0
    %945 = vmatpush1.msra.mxu0 0.0
    %946 = vmatprep.subr.mxu0 0.0
    %947 = vmatpush1.msra.mxu0 0.0
    %948 = vmatprep.subr.mxu0 0.0
    %949 = vmatpush1.msra.mxu0 0.0
    %950 = vmatprep.subr.mxu0 0.0
    %951 = vmatpush1.msra.mxu0 0.0
    %952 = vmatprep.subr.mxu0 0.0
    %953 = vmatpush1.msra.mxu0 0.0
    %954 = vmatprep.subr.mxu0 0.0
    %955 = vmatpush1.msra.mxu0 0.0
    %956 = vmatprep.subr.mxu0 0.0
    %957 = vmatpush1.msra.mxu0 0.0
    %958 = vmatprep.subr.mxu0 0.0
    %959 = vmatpush1.msra.mxu0 0.0
    %960 = vmatprep.subr.mxu0 0.0
    %961 = vmatpush1.msra.mxu0 0.0
    %962 = vmatprep.subr.mxu0 0.0
    %963 = vmatpush1.msra.mxu0 0.0
    %964 = vmatprep.mubr.f32.mxu0 0.0
    %965 = vmatmul.mubr.f32.gmra.mrb[0].mxu0 %v531
    %v966 = vpop.f32.mrb[0].mxu0
    %v967 = vadd.f32 0.0, %v966
    %v968 = vpop.f32.mrb[0].mxu0
    %969 = vmatprep.mubr.f32.mxu0 0.0
    %970 = vmatmul.mubr.f32.gmra.mrb[0].mxu0 %v534
    %v971 = vpop.f32.mrb[0].mxu0
    %v972 = vadd.f32 0.0, %v971
    %v973 = vpop.f32.mrb[0].mxu0
    %974 = vdwg.mxu0
    %975 = vmatprep.subr.mxu0 0.0
    %976 = vmatpush1.msra.mxu0 %v880
    %977 = vmatprep.subr.mxu0 0.0
    %978 = vmatpush1.msra.mxu0 %v881
    %979 = vmatprep.subr.mxu0 0.0
    %980 = vmatpush1.msra.mxu0 %v882
    %981 = vmatprep.subr.mxu0 0.0
    %982 = vmatpush1.msra.mxu0 %v883
    %983 = vmatprep.subr.mxu0 0.0
    %984 = vmatpush1.msra.mxu0 %v884
    %985 = vmatprep.subr.mxu0 0.0
    %986 = vmatpush1.msra.mxu0 %v885
    %987 = vmatprep.subr.mxu0 0.0
    %988 = vmatpush1.msra.mxu0 %v886
    %989 = vmatprep.subr.mxu0 0.0
    %990 = vmatpush1.msra.mxu0 %v887
    %991 = vmatprep.subr.mxu0 0.0
    %992 = vmatpush1.msra.mxu0 0.0
    %993 = vmatprep.subr.mxu0 0.0
    %994 = vmatpush1.msra.mxu0 0.0
    %995 = vmatprep.subr.mxu0 0.0
    %996 = vmatpush1.msra.mxu0 0.0
    %997 = vmatprep.subr.mxu0 0.0
    %998 = vmatpush1.msra.mxu0 0.0
    %999 = vmatprep.subr.mxu0 0.0
    %1000 = vmatpush1.msra.mxu0 0.0
    %1001 = vmatprep.subr.mxu0 0.0
    %1002 = vmatpush1.msra.mxu0 0.0
    %1003 = vmatprep.subr.mxu0 0.0
    %1004 = vmatpush1.msra.mxu0 0.0
    %1005 = vmatprep.subr.mxu0 0.0
    %1006 = vmatpush1.msra.mxu0 0.0
    %1007 = vmatprep.subr.mxu0 0.0
    %1008 = vmatpush1.msra.mxu0 0.0
    %1009 = vmatprep.subr.mxu0 0.0
    %1010 = vmatpush1.msra.mxu0 0.0
    %1011 = vmatprep.subr.mxu0 0.0
    %1012 = vmatpush1.msra.mxu0 0.0
    %1013 = vmatprep.subr.mxu0 0.0
    %1014 = vmatpush1.msra.mxu0 0.0
    %1015 = vmatprep.subr.mxu0 0.0
    %1016 = vmatpush1.msra.mxu0 0.0
    %1017 = vmatprep.subr.mxu0 0.0
    %1018 = vmatpush1.msra.mxu0 0.0
    %1019 = vmatprep.subr.mxu0 0.0
    %1020 = vmatpush1.msra.mxu0 0.0
    %1021 = vmatprep.subr.mxu0 0.0
    %1022 = vmatpush1.msra.mxu0 0.0
    %1023 = vmatprep.subr.mxu0 0.0
    %1024 = vmatpush1.msra.mxu0 0.0
    %1025 = vmatprep.subr.mxu0 0.0
    %1026 = vmatpush1.msra.mxu0 0.0
    %1027 = vmatprep.subr.mxu0 0.0
    %1028 = vmatpush1.msra.mxu0 0.0
    %1029 = vmatprep.subr.mxu0 0.0
    %1030 = vmatpush1.msra.mxu0 0.0
    %1031 = vmatprep.subr.mxu0 0.0
    %1032 = vmatpush1.msra.mxu0 0.0
    %1033 = vmatprep.subr.mxu0 0.0
    %1034 = vmatpush1.msra.mxu0 0.0
    %1035 = vmatprep.subr.mxu0 0.0
    %1036 = vmatpush1.msra.mxu0 0.0
    %1037 = vmatprep.subr.mxu0 0.0
    %1038 = vmatpush1.msra.mxu0 0.0
    %1039 = vmatprep.mubr.f32.mxu0 0.0
    %1040 = vmatmul.mubr.f32.gmra.mrb[0].mxu0 %v616
    %v1041 = vpop.f32.mrb[0].mxu0
    %v1042 = vadd.f32 %v967, %v1041
    %v1043 = vpop.f32.mrb[0].mxu0
    %1044 = vmatprep.mubr.f32.mxu0 0.0
    %1045 = vmatmul.mubr.f32.gmra.mrb[0].mxu0 %v619
    %v1046 = vpop.f32.mrb[0].mxu0
    %v1047 = vadd.f32 %v972, %v1046
    %v1048 = vpop.f32.mrb[0].mxu0
    %1049 = vdwg.mxu0
    %s1050 = scalar_lea.vmem %s8, 64
    %v1051 = vld [vmem:[%s1050] sm:$0xff]
    %v1052 = vld [vmem:[%s1050 + $0x8] sm:$0xff]
    %v1053 = vld [vmem:[%s1050 + $0x10] sm:$0xff]
    %v1054 = vld [vmem:[%s1050 + $0x18] sm:$0xff]
    %v1055 = vld [vmem:[%s1050 + $0x20] sm:$0xff]
    %v1056 = vld [vmem:[%s1050 + $0x28] sm:$0xff]
    %v1057 = vld [vmem:[%s1050 + $0x30] sm:$0xff]
    %v1058 = vld [vmem:[%s1050 + $0x38] sm:$0xff]
    %s1059 = scalar_lea.vmem %s9, 72
    %v1060 = vld [vmem:[%s1059] sm:$0xff]
    %v1061 = vld [vmem:[%s1059 + $0x8] sm:$0xff]
    %v1062 = vld [vmem:[%s1059 + $0x10] sm:$0xff]
    %v1063 = vld [vmem:[%s1059 + $0x18] sm:$0xff]
    %v1064 = vld [vmem:[%s1059 + $0x20] sm:$0xff]
    %v1065 = vld [vmem:[%s1059 + $0x28] sm:$0xff]
    %v1066 = vld [vmem:[%s1059 + $0x30] sm:$0xff]
    %v1067 = vld [vmem:[%s1059 + $0x38] sm:$0xff]
    %v1068 = vld [vmem:[%s1059 + $0x40] sm:$0xf]
    %v1070 = vsel %vm536, %v1068, 0
    %1072 = vmatprep.subr.mxu0 0.0
    %1073 = vmatpush1.msra.mxu0 %v1060
    %1074 = vmatprep.subr.mxu0 0.0
    %1075 = vmatpush1.msra.mxu0 %v1061
    %1076 = vmatprep.subr.mxu0 0.0
    %1077 = vmatpush1.msra.mxu0 %v1062
    %1078 = vmatprep.subr.mxu0 0.0
    %1079 = vmatpush1.msra.mxu0 %v1063
    %1080 = vmatprep.subr.mxu0 0.0
    %1081 = vmatpush1.msra.mxu0 %v1064
    %1082 = vmatprep.subr.mxu0 0.0
    %1083 = vmatpush1.msra.mxu0 %v1065
    %1084 = vmatprep.subr.mxu0 0.0
    %1085 = vmatpush1.msra.mxu0 %v1066
    %1086 = vmatprep.subr.mxu0 0.0
    %1087 = vmatpush1.msra.mxu0 %v1067
    %1088 = vmatprep.subr.mxu0 0.0
    %1089 = vmatpush1.msra.mxu0 %v1070
    %1090 = vmatprep.subr.mxu0 0.0
    %1091 = vmatpush1.msra.mxu0 0.0
    %1092 = vmatprep.subr.mxu0 0.0
    %1093 = vmatpush1.msra.mxu0 0.0
    %1094 = vmatprep.subr.mxu0 0.0
    %1095 = vmatpush1.msra.mxu0 0.0
    %1096 = vmatprep.subr.mxu0 0.0
    %1097 = vmatpush1.msra.mxu0 0.0
    %1098 = vmatprep.subr.mxu0 0.0
    %1099 = vmatpush1.msra.mxu0 0.0
    %1100 = vmatprep.subr.mxu0 0.0
    %1101 = vmatpush1.msra.mxu0 0.0
    %1102 = vmatprep.subr.mxu0 0.0
    %1103 = vmatpush1.msra.mxu0 0.0
    %1104 = vmatprep.subr.mxu0 0.0
    %1105 = vmatpush1.msra.mxu0 0.0
    %1106 = vmatprep.subr.mxu0 0.0
    %1107 = vmatpush1.msra.mxu0 0.0
    %1108 = vmatprep.subr.mxu0 0.0
    %1109 = vmatpush1.msra.mxu0 0.0
    %1110 = vmatprep.subr.mxu0 0.0
    %1111 = vmatpush1.msra.mxu0 0.0
    %1112 = vmatprep.subr.mxu0 0.0
    %1113 = vmatpush1.msra.mxu0 0.0
    %1114 = vmatprep.subr.mxu0 0.0
    %1115 = vmatpush1.msra.mxu0 0.0
    %1116 = vmatprep.subr.mxu0 0.0
    %1117 = vmatpush1.msra.mxu0 0.0
    %1118 = vmatprep.subr.mxu0 0.0
    %1119 = vmatpush1.msra.mxu0 0.0
    %1120 = vmatprep.subr.mxu0 0.0
    %1121 = vmatpush1.msra.mxu0 0.0
    %1122 = vmatprep.subr.mxu0 0.0
    %1123 = vmatpush1.msra.mxu0 0.0
    %1124 = vmatprep.subr.mxu0 0.0
    %1125 = vmatpush1.msra.mxu0 0.0
    %1126 = vmatprep.subr.mxu0 0.0
    %1127 = vmatpush1.msra.mxu0 0.0
    %1128 = vmatprep.subr.mxu0 0.0
    %1129 = vmatpush1.msra.mxu0 0.0
    %1130 = vmatprep.subr.mxu0 0.0
    %1131 = vmatpush1.msra.mxu0 0.0
    %1132 = vmatprep.subr.mxu0 0.0
    %1133 = vmatpush1.msra.mxu0 0.0
    %1134 = vmatprep.subr.mxu0 0.0
    %1135 = vmatpush1.msra.mxu0 0.0
    %1136 = vmatprep.mubr.f32.mxu0 0.0
    %1137 = vmatmul.mubr.f32.gmra.mrb[0].mxu0 %v716
    %v1138 = vpop.f32.mrb[0].mxu0
    %v1139 = vadd.f32 0.0, %v1138
    %v1140 = vpop.f32.mrb[0].mxu0
    %1141 = vmatprep.mubr.f32.mxu0 0.0
    %1142 = vmatmul.mubr.f32.gmra.mrb[0].mxu0 %v719
    %v1143 = vpop.f32.mrb[0].mxu0
    %v1144 = vadd.f32 0.0, %v1143
    %v1145 = vpop.f32.mrb[0].mxu0
    %1146 = vdwg.mxu0
    %1147 = vmatprep.subr.mxu0 0.0
    %1148 = vmatpush1.msra.mxu0 %v1051
    %1149 = vmatprep.subr.mxu0 0.0
    %1150 = vmatpush1.msra.mxu0 %v1052
    %1151 = vmatprep.subr.mxu0 0.0
    %1152 = vmatpush1.msra.mxu0 %v1053
    %1153 = vmatprep.subr.mxu0 0.0
    %1154 = vmatpush1.msra.mxu0 %v1054
    %1155 = vmatprep.subr.mxu0 0.0
    %1156 = vmatpush1.msra.mxu0 %v1055
    %1157 = vmatprep.subr.mxu0 0.0
    %1158 = vmatpush1.msra.mxu0 %v1056
    %1159 = vmatprep.subr.mxu0 0.0
    %1160 = vmatpush1.msra.mxu0 %v1057
    %1161 = vmatprep.subr.mxu0 0.0
    %1162 = vmatpush1.msra.mxu0 %v1058
    %1163 = vmatprep.subr.mxu0 0.0
    %1164 = vmatpush1.msra.mxu0 0.0
    %1165 = vmatprep.subr.mxu0 0.0
    %1166 = vmatpush1.msra.mxu0 0.0
    %1167 = vmatprep.subr.mxu0 0.0
    %1168 = vmatpush1.msra.mxu0 0.0
    %1169 = vmatprep.subr.mxu0 0.0
    %1170 = vmatpush1.msra.mxu0 0.0
    %1171 = vmatprep.subr.mxu0 0.0
    %1172 = vmatpush1.msra.mxu0 0.0
    %1173 = vmatprep.subr.mxu0 0.0
    %1174 = vmatpush1.msra.mxu0 0.0
    %1175 = vmatprep.subr.mxu0 0.0
    %1176 = vmatpush1.msra.mxu0 0.0
    %1177 = vmatprep.subr.mxu0 0.0
    %1178 = vmatpush1.msra.mxu0 0.0
    %1179 = vmatprep.subr.mxu0 0.0
    %1180 = vmatpush1.msra.mxu0 0.0
    %1181 = vmatprep.subr.mxu0 0.0
    %1182 = vmatpush1.msra.mxu0 0.0
    %1183 = vmatprep.subr.mxu0 0.0
    %1184 = vmatpush1.msra.mxu0 0.0
    %1185 = vmatprep.subr.mxu0 0.0
    %1186 = vmatpush1.msra.mxu0 0.0
    %1187 = vmatprep.subr.mxu0 0.0
    %1188 = vmatpush1.msra.mxu0 0.0
    %1189 = vmatprep.subr.mxu0 0.0
    %1190 = vmatpush1.msra.mxu0 0.0
    %1191 = vmatprep.subr.mxu0 0.0
    %1192 = vmatpush1.msra.mxu0 0.0
    %1193 = vmatprep.subr.mxu0 0.0
    %1194 = vmatpush1.msra.mxu0 0.0
    %1195 = vmatprep.subr.mxu0 0.0
    %1196 = vmatpush1.msra.mxu0 0.0
    %1197 = vmatprep.subr.mxu0 0.0
    %1198 = vmatpush1.msra.mxu0 0.0
    %1199 = vmatprep.subr.mxu0 0.0
    %1200 = vmatpush1.msra.mxu0 0.0
    %1201 = vmatprep.subr.mxu0 0.0
    %1202 = vmatpush1.msra.mxu0 0.0
    %1203 = vmatprep.subr.mxu0 0.0
    %1204 = vmatpush1.msra.mxu0 0.0
    %1205 = vmatprep.subr.mxu0 0.0
    %1206 = vmatpush1.msra.mxu0 0.0
    %1207 = vmatprep.subr.mxu0 0.0
    %1208 = vmatpush1.msra.mxu0 0.0
    %1209 = vmatprep.subr.mxu0 0.0
    %1210 = vmatpush1.msra.mxu0 0.0
    %1211 = vmatprep.mubr.f32.mxu0 0.0
    %1212 = vmatmul.mubr.f32.gmra.mrb[0].mxu0 %v800
    %v1213 = vpop.f32.mrb[0].mxu0
    %v1214 = vadd.f32 %v1139, %v1213
    %v1215 = vpop.f32.mrb[0].mxu0
    %1216 = vmatprep.mubr.f32.mxu0 0.0
    %1217 = vmatmul.mubr.f32.gmra.mrb[0].mxu0 %v803
    %v1218 = vpop.f32.mrb[0].mxu0
    %v1219 = vadd.f32 %v1144, %v1218
    %v1220 = vpop.f32.mrb[0].mxu0
    %1221 = vdwg.mxu0
    %1222 = vmatprep.subr.mxu0 0.0
    %1223 = vmatpush1.msra.mxu0 %v688
    %1224 = vmatprep.subr.mxu0 0.0
    %1225 = vmatpush1.msra.mxu0 %v693
    %1226 = vmatprep.subr.mxu0 0.0
    %1227 = vmatpush1.msra.mxu0 0.0
    %1228 = vmatprep.subr.mxu0 0.0
    %1229 = vmatpush1.msra.mxu0 0.0
    %1230 = vmatprep.subr.mxu0 0.0
    %1231 = vmatpush1.msra.mxu0 0.0
    %1232 = vmatprep.subr.mxu0 0.0
    %1233 = vmatpush1.msra.mxu0 0.0
    %1234 = vmatprep.subr.mxu0 0.0
    %1235 = vmatpush1.msra.mxu0 0.0
    %1236 = vmatprep.subr.mxu0 0.0
    %1237 = vmatpush1.msra.mxu0 0.0
    %1238 = vmatprep.subr.mxu0 0.0
    %1239 = vmatpush1.msra.mxu0 0.0
    %1240 = vmatprep.subr.mxu0 0.0
    %1241 = vmatpush1.msra.mxu0 0.0
    %1242 = vmatprep.subr.mxu0 0.0
    %1243 = vmatpush1.msra.mxu0 0.0
    %1244 = vmatprep.subr.mxu0 0.0
    %1245 = vmatpush1.msra.mxu0 0.0
    %1246 = vmatprep.subr.mxu0 0.0
    %1247 = vmatpush1.msra.mxu0 0.0
    %1248 = vmatprep.subr.mxu0 0.0
    %1249 = vmatpush1.msra.mxu0 0.0
    %1250 = vmatprep.subr.mxu0 0.0
    %1251 = vmatpush1.msra.mxu0 0.0
    %1252 = vmatprep.subr.mxu0 0.0
    %1253 = vmatpush1.msra.mxu0 0.0
    %1254 = vmatprep.subr.mxu0 0.0
    %1255 = vmatpush1.msra.mxu0 0.0
    %1256 = vmatprep.subr.mxu0 0.0
    %1257 = vmatpush1.msra.mxu0 0.0
    %1258 = vmatprep.subr.mxu0 0.0
    %1259 = vmatpush1.msra.mxu0 0.0
    %1260 = vmatprep.subr.mxu0 0.0
    %1261 = vmatpush1.msra.mxu0 0.0
    %1262 = vmatprep.subr.mxu0 0.0
    %1263 = vmatpush1.msra.mxu0 0.0
    %1264 = vmatprep.subr.mxu0 0.0
    %1265 = vmatpush1.msra.mxu0 0.0
    %1266 = vmatprep.subr.mxu0 0.0
    %1267 = vmatpush1.msra.mxu0 0.0
    %1268 = vmatprep.subr.mxu0 0.0
    %1269 = vmatpush1.msra.mxu0 0.0
    %1270 = vmatprep.subr.mxu0 0.0
    %1271 = vmatpush1.msra.mxu0 0.0
    %1272 = vmatprep.subr.mxu0 0.0
    %1273 = vmatpush1.msra.mxu0 0.0
    %1274 = vmatprep.subr.mxu0 0.0
    %1275 = vmatpush1.msra.mxu0 0.0
    %1276 = vmatprep.subr.mxu0 0.0
    %1277 = vmatpush1.msra.mxu0 0.0
    %1278 = vmatprep.subr.mxu0 0.0
    %1279 = vmatpush1.msra.mxu0 0.0
    %1280 = vmatprep.subr.mxu0 0.0
    %1281 = vmatpush1.msra.mxu0 0.0
    %1282 = vmatprep.subr.mxu0 0.0
    %1283 = vmatpush1.msra.mxu0 0.0
    %1284 = vmatprep.subr.mxu0 0.0
    %1285 = vmatpush1.msra.mxu0 0.0
    %1286 = vmatprep.mubr.f32.mxu0 0.0
    %1287 = vmatmul.mubr.f32.gmra.mrb[0].mxu0 %v76
    %v1288 = vpop.f32.mrb[0].mxu0
    %v1289 = vadd.f32 %v45, %v1288
    %v1290 = vpop.f32.mrb[0].mxu0
    %1291 = vmatprep.mubr.f32.mxu0 0.0
    %1292 = vmatmul.mubr.f32.gmra.mrb[0].mxu0 %v79
    %v1293 = vpop.f32.mrb[0].mxu0
    %v1294 = vadd.f32 %v50, %v1293
    %v1295 = vpop.f32.mrb[0].mxu0
    %1296 = vdwg.mxu0
    %v1297 = vmax.f32 %v1289, 0.0
    %v1298 = vmax.f32 %v1294, 0.0
    %v1299 = vadd.f32 %v688, %v1297
    %v1300 = vadd.f32 %v693, %v1298
    %1301 = vmatprep.subr.mxu0 0.0
    %1302 = vmatpush1.msra.mxu0 %v872
    %1303 = vmatprep.subr.mxu0 0.0
    %1304 = vmatpush1.msra.mxu0 %v877
    %1305 = vmatprep.subr.mxu0 0.0
    %1306 = vmatpush1.msra.mxu0 0.0
    %1307 = vmatprep.subr.mxu0 0.0
    %1308 = vmatpush1.msra.mxu0 0.0
    %1309 = vmatprep.subr.mxu0 0.0
    %1310 = vmatpush1.msra.mxu0 0.0
    %1311 = vmatprep.subr.mxu0 0.0
    %1312 = vmatpush1.msra.mxu0 0.0
    %1313 = vmatprep.subr.mxu0 0.0
    %1314 = vmatpush1.msra.mxu0 0.0
    %1315 = vmatprep.subr.mxu0 0.0
    %1316 = vmatpush1.msra.mxu0 0.0
    %1317 = vmatprep.subr.mxu0 0.0
    %1318 = vmatpush1.msra.mxu0 0.0
    %1319 = vmatprep.subr.mxu0 0.0
    %1320 = vmatpush1.msra.mxu0 0.0
    %1321 = vmatprep.subr.mxu0 0.0
    %1322 = vmatpush1.msra.mxu0 0.0
    %1323 = vmatprep.subr.mxu0 0.0
    %1324 = vmatpush1.msra.mxu0 0.0
    %1325 = vmatprep.subr.mxu0 0.0
    %1326 = vmatpush1.msra.mxu0 0.0
    %1327 = vmatprep.subr.mxu0 0.0
    %1328 = vmatpush1.msra.mxu0 0.0
    %1329 = vmatprep.subr.mxu0 0.0
    %1330 = vmatpush1.msra.mxu0 0.0
    %1331 = vmatprep.subr.mxu0 0.0
    %1332 = vmatpush1.msra.mxu0 0.0
    %1333 = vmatprep.subr.mxu0 0.0
    %1334 = vmatpush1.msra.mxu0 0.0
    %1335 = vmatprep.subr.mxu0 0.0
    %1336 = vmatpush1.msra.mxu0 0.0
    %1337 = vmatprep.subr.mxu0 0.0
    %1338 = vmatpush1.msra.mxu0 0.0
    %1339 = vmatprep.subr.mxu0 0.0
    %1340 = vmatpush1.msra.mxu0 0.0
    %1341 = vmatprep.subr.mxu0 0.0
    %1342 = vmatpush1.msra.mxu0 0.0
    %1343 = vmatprep.subr.mxu0 0.0
    %1344 = vmatpush1.msra.mxu0 0.0
    %1345 = vmatprep.subr.mxu0 0.0
    %1346 = vmatpush1.msra.mxu0 0.0
    %1347 = vmatprep.subr.mxu0 0.0
    %1348 = vmatpush1.msra.mxu0 0.0
    %1349 = vmatprep.subr.mxu0 0.0
    %1350 = vmatpush1.msra.mxu0 0.0
    %1351 = vmatprep.subr.mxu0 0.0
    %1352 = vmatpush1.msra.mxu0 0.0
    %1353 = vmatprep.subr.mxu0 0.0
    %1354 = vmatpush1.msra.mxu0 0.0
    %1355 = vmatprep.subr.mxu0 0.0
    %1356 = vmatpush1.msra.mxu0 0.0
    %1357 = vmatprep.subr.mxu0 0.0
    %1358 = vmatpush1.msra.mxu0 0.0
    %1359 = vmatprep.subr.mxu0 0.0
    %1360 = vmatpush1.msra.mxu0 0.0
    %1361 = vmatprep.subr.mxu0 0.0
    %1362 = vmatpush1.msra.mxu0 0.0
    %1363 = vmatprep.subr.mxu0 0.0
    %1364 = vmatpush1.msra.mxu0 0.0
    %1365 = vmatprep.mubr.f32.mxu0 0.0
    %1366 = vmatmul.mubr.f32.gmra.mrb[0].mxu0 %v76
    %v1367 = vpop.f32.mrb[0].mxu0
    %v1368 = vadd.f32 %v45, %v1367
    %v1369 = vpop.f32.mrb[0].mxu0
    %1370 = vmatprep.mubr.f32.mxu0 0.0
    %1371 = vmatmul.mubr.f32.gmra.mrb[0].mxu0 %v79
    %v1372 = vpop.f32.mrb[0].mxu0
    %v1373 = vadd.f32 %v50, %v1372
    %v1374 = vpop.f32.mrb[0].mxu0
    %1375 = vdwg.mxu0
    %v1376 = vmax.f32 %v1368, 0.0
    %v1377 = vmax.f32 %v1373, 0.0
    %v1378 = vadd.f32 %v872, %v1376
    %v1379 = vadd.f32 %v877, %v1377
    %1380 = vmatprep.subr.mxu0 0.0
    %1381 = vmatpush1.msra.mxu0 %v1042
    %1382 = vmatprep.subr.mxu0 0.0
    %1383 = vmatpush1.msra.mxu0 %v1047
    %1384 = vmatprep.subr.mxu0 0.0
    %1385 = vmatpush1.msra.mxu0 0.0
    %1386 = vmatprep.subr.mxu0 0.0
    %1387 = vmatpush1.msra.mxu0 0.0
    %1388 = vmatprep.subr.mxu0 0.0
    %1389 = vmatpush1.msra.mxu0 0.0
    %1390 = vmatprep.subr.mxu0 0.0
    %1391 = vmatpush1.msra.mxu0 0.0
    %1392 = vmatprep.subr.mxu0 0.0
    %1393 = vmatpush1.msra.mxu0 0.0
    %1394 = vmatprep.subr.mxu0 0.0
    %1395 = vmatpush1.msra.mxu0 0.0
    %1396 = vmatprep.subr.mxu0 0.0
    %1397 = vmatpush1.msra.mxu0 0.0
    %1398 = vmatprep.subr.mxu0 0.0
    %1399 = vmatpush1.msra.mxu0 0.0
    %1400 = vmatprep.subr.mxu0 0.0
    %1401 = vmatpush1.msra.mxu0 0.0
    %1402 = vmatprep.subr.mxu0 0.0
    %1403 = vmatpush1.msra.mxu0 0.0
    %1404 = vmatprep.subr.mxu0 0.0
    %1405 = vmatpush1.msra.mxu0 0.0
    %1406 = vmatprep.subr.mxu0 0.0
    %1407 = vmatpush1.msra.mxu0 0.0
    %1408 = vmatprep.subr.mxu0 0.0
    %1409 = vmatpush1.msra.mxu0 0.0
    %1410 = vmatprep.subr.mxu0 0.0
    %1411 = vmatpush1.msra.mxu0 0.0
    %1412 = vmatprep.subr.mxu0 0.0
    %1413 = vmatpush1.msra.mxu0 0.0
    %1414 = vmatprep.subr.mxu0 0.0
    %1415 = vmatpush1.msra.mxu0 0.0
    %1416 = vmatprep.subr.mxu0 0.0
    %1417 = vmatpush1.msra.mxu0 0.0
    %1418 = vmatprep.subr.mxu0 0.0
    %1419 = vmatpush1.msra.mxu0 0.0
    %1420 = vmatprep.subr.mxu0 0.0
    %1421 = vmatpush1.msra.mxu0 0.0
    %1422 = vmatprep.subr.mxu0 0.0
    %1423 = vmatpush1.msra.mxu0 0.0
    %1424 = vmatprep.subr.mxu0 0.0
    %1425 = vmatpush1.msra.mxu0 0.0
    %1426 = vmatprep.subr.mxu0 0.0
    %1427 = vmatpush1.msra.mxu0 0.0
    %1428 = vmatprep.subr.mxu0 0.0
    %1429 = vmatpush1.msra.mxu0 0.0
    %1430 = vmatprep.subr.mxu0 0.0
    %1431 = vmatpush1.msra.mxu0 0.0
    %1432 = vmatprep.subr.mxu0 0.0
    %1433 = vmatpush1.msra.mxu0 0.0
    %1434 = vmatprep.subr.mxu0 0.0
    %1435 = vmatpush1.msra.mxu0 0.0
    %1436 = vmatprep.subr.mxu0 0.0
    %1437 = vmatpush1.msra.mxu0 0.0
    %1438 = vmatprep.subr.mxu0 0.0
    %1439 = vmatpush1.msra.mxu0 0.0
    %1440 = vmatprep.subr.mxu0 0.0
    %1441 = vmatpush1.msra.mxu0 0.0
    %1442 = vmatprep.subr.mxu0 0.0
    %1443 = vmatpush1.msra.mxu0 0.0
    %1444 = vmatprep.mubr.f32.mxu0 0.0
    %1445 = vmatmul.mubr.f32.gmra.mrb[0].mxu0 %v240
    %v1446 = vpop.f32.mrb[0].mxu0
    %v1447 = vadd.f32 %v57, %v1446
    %v1448 = vpop.f32.mrb[0].mxu0
    %1449 = vmatprep.mubr.f32.mxu0 0.0
    %1450 = vmatmul.mubr.f32.gmra.mrb[0].mxu0 %v243
    %v1451 = vpop.f32.mrb[0].mxu0
    %v1452 = vadd.f32 %v62, %v1451
    %v1453 = vpop.f32.mrb[0].mxu0
    %1454 = vdwg.mxu0
    %v1455 = vmax.f32 %v1447, 0.0
    %v1456 = vmax.f32 %v1452, 0.0
    %v1457 = vadd.f32 %v1042, %v1455
    %v1458 = vadd.f32 %v1047, %v1456
    %1459 = vmatprep.subr.mxu0 0.0
    %1460 = vmatpush1.msra.mxu0 %v1214
    %1461 = vmatprep.subr.mxu0 0.0
    %1462 = vmatpush1.msra.mxu0 %v1219
    %1463 = vmatprep.subr.mxu0 0.0
    %1464 = vmatpush1.msra.mxu0 0.0
    %1465 = vmatprep.subr.mxu0 0.0
    %1466 = vmatpush1.msra.mxu0 0.0
    %1467 = vmatprep.subr.mxu0 0.0
    %1468 = vmatpush1.msra.mxu0 0.0
    %1469 = vmatprep.subr.mxu0 0.0
    %1470 = vmatpush1.msra.mxu0 0.0
    %1471 = vmatprep.subr.mxu0 0.0
    %1472 = vmatpush1.msra.mxu0 0.0
    %1473 = vmatprep.subr.mxu0 0.0
    %1474 = vmatpush1.msra.mxu0 0.0
    %1475 = vmatprep.subr.mxu0 0.0
    %1476 = vmatpush1.msra.mxu0 0.0
    %1477 = vmatprep.subr.mxu0 0.0
    %1478 = vmatpush1.msra.mxu0 0.0
    %1479 = vmatprep.subr.mxu0 0.0
    %1480 = vmatpush1.msra.mxu0 0.0
    %1481 = vmatprep.subr.mxu0 0.0
    %1482 = vmatpush1.msra.mxu0 0.0
    %1483 = vmatprep.subr.mxu0 0.0
    %1484 = vmatpush1.msra.mxu0 0.0
    %1485 = vmatprep.subr.mxu0 0.0
    %1486 = vmatpush1.msra.mxu0 0.0
    %1487 = vmatprep.subr.mxu0 0.0
    %1488 = vmatpush1.msra.mxu0 0.0
    %1489 = vmatprep.subr.mxu0 0.0
    %1490 = vmatpush1.msra.mxu0 0.0
    %1491 = vmatprep.subr.mxu0 0.0
    %1492 = vmatpush1.msra.mxu0 0.0
    %1493 = vmatprep.subr.mxu0 0.0
    %1494 = vmatpush1.msra.mxu0 0.0
    %1495 = vmatprep.subr.mxu0 0.0
    %1496 = vmatpush1.msra.mxu0 0.0
    %1497 = vmatprep.subr.mxu0 0.0
    %1498 = vmatpush1.msra.mxu0 0.0
    %1499 = vmatprep.subr.mxu0 0.0
    %1500 = vmatpush1.msra.mxu0 0.0
    %1501 = vmatprep.subr.mxu0 0.0
    %1502 = vmatpush1.msra.mxu0 0.0
    %1503 = vmatprep.subr.mxu0 0.0
    %1504 = vmatpush1.msra.mxu0 0.0
    %1505 = vmatprep.subr.mxu0 0.0
    %1506 = vmatpush1.msra.mxu0 0.0
    %1507 = vmatprep.subr.mxu0 0.0
    %1508 = vmatpush1.msra.mxu0 0.0
    %1509 = vmatprep.subr.mxu0 0.0
    %1510 = vmatpush1.msra.mxu0 0.0
    %1511 = vmatprep.subr.mxu0 0.0
    %1512 = vmatpush1.msra.mxu0 0.0
    %1513 = vmatprep.subr.mxu0 0.0
    %1514 = vmatpush1.msra.mxu0 0.0
    %1515 = vmatprep.subr.mxu0 0.0
    %1516 = vmatpush1.msra.mxu0 0.0
    %1517 = vmatprep.subr.mxu0 0.0
    %1518 = vmatpush1.msra.mxu0 0.0
    %1519 = vmatprep.subr.mxu0 0.0
    %1520 = vmatpush1.msra.mxu0 0.0
    %1521 = vmatprep.subr.mxu0 0.0
    %1522 = vmatpush1.msra.mxu0 0.0
    %1523 = vmatprep.mubr.f32.mxu0 0.0
    %1524 = vmatmul.mubr.f32.gmra.mrb[0].mxu0 %v240
    %v1525 = vpop.f32.mrb[0].mxu0
    %v1526 = vadd.f32 %v57, %v1525
    %v1527 = vpop.f32.mrb[0].mxu0
    %1528 = vmatprep.mubr.f32.mxu0 0.0
    %1529 = vmatmul.mubr.f32.gmra.mrb[0].mxu0 %v243
    %v1530 = vpop.f32.mrb[0].mxu0
    %v1531 = vadd.f32 %v62, %v1530
    %v1532 = vpop.f32.mrb[0].mxu0
    %1533 = vdwg.mxu0
    %v1534 = vmax.f32 %v1526, 0.0
    %v1535 = vmax.f32 %v1531, 0.0
    %v1536 = vadd.f32 %v1214, %v1534
    %v1537 = vadd.f32 %v1219, %v1535
    %v1538 = vsel %vm403, %v1299, 0.0
    %v1539 = vsel %vm403, %v1300, 0.0
    %v1540 = vadd.f32 %v1538, %v1539
    %v1541 = vrot.slane %v1540, 4
    %v1542 = vadd.f32 %v1540, %v1541
    %v1543 = vrot.slane %v1542, 2
    %v1544 = vadd.f32 %v1542, %v1543
    %v1545 = vrot.slane %v1544, 1
    %v1546 = vadd.f32 %v1544, %v1545
    %v1547 = vsel %vm403, %v1378, 0.0
    %v1548 = vsel %vm403, %v1379, 0.0
    %v1549 = vadd.f32 %v1547, %v1548
    %v1550 = vrot.slane %v1549, 4
    %v1551 = vadd.f32 %v1549, %v1550
    %v1552 = vrot.slane %v1551, 2
    %v1553 = vadd.f32 %v1551, %v1552
    %v1554 = vrot.slane %v1553, 1
    %v1555 = vadd.f32 %v1553, %v1554
    %v1556 = vadd.f32 %v1546, %v1555
    %v1557 = vmul.f32 %v1556, 0.03125
    %v1558 = vsub.f32 %v1299, %v1557
    %v1559 = vsub.f32 %v1300, %v1557
    %v1560 = vsub.f32 %v1378, %v1557
    %v1561 = vsub.f32 %v1379, %v1557
    %v1562 = vmul.f32 %v1558, %v1558
    %v1563 = vmul.f32 %v1559, %v1559
    %v1564 = vsel %vm403, %v1562, 0.0
    %v1565 = vsel %vm403, %v1563, 0.0
    %v1566 = vadd.f32 %v1564, %v1565
    %v1567 = vrot.slane %v1566, 4
    %v1568 = vadd.f32 %v1566, %v1567
    %v1569 = vrot.slane %v1568, 2
    %v1570 = vadd.f32 %v1568, %v1569
    %v1571 = vrot.slane %v1570, 1
    %v1572 = vadd.f32 %v1570, %v1571
    %v1573 = vmul.f32 %v1560, %v1560
    %v1574 = vmul.f32 %v1561, %v1561
    %v1575 = vsel %vm403, %v1573, 0.0
    %v1576 = vsel %vm403, %v1574, 0.0
    %v1577 = vadd.f32 %v1575, %v1576
    %v1578 = vrot.slane %v1577, 4
    %v1579 = vadd.f32 %v1577, %v1578
    %v1580 = vrot.slane %v1579, 2
    %v1581 = vadd.f32 %v1579, %v1580
    %v1582 = vrot.slane %v1581, 1
    %v1583 = vadd.f32 %v1581, %v1582
    %v1584 = vadd.f32 %v1572, %v1583
    %v1585 = vmul.f32 %v1584, 0.03125
    %v1586 = vadd.f32 %v1585, 1e-05
    %v1587 = vrsqrt.pop %v1586
    %v1588 = vmul.f32 %v1558, %v1587
    %v1589 = vmul.f32 %v1559, %v1587
    %v1590 = vmul.f32 %v1560, %v1587
    %v1591 = vmul.f32 %v1561, %v1587
    %v1592 = vsel %vm458, %v1457, 0.0
    %v1593 = vsel %vm458, %v1458, 0.0
    %v1594 = vadd.f32 %v1592, %v1593
    %v1595 = vrot.slane %v1594, 4
    %v1596 = vadd.f32 %v1594, %v1595
    %v1597 = vrot.slane %v1596, 2
    %v1598 = vadd.f32 %v1596, %v1597
    %v1599 = vrot.slane %v1598, 1
    %v1600 = vadd.f32 %v1598, %v1599
    %v1601 = vsel %vm458, %v1536, 0.0
    %v1602 = vsel %vm458, %v1537, 0.0
    %v1603 = vadd.f32 %v1601, %v1602
    %v1604 = vrot.slane %v1603, 4
    %v1605 = vadd.f32 %v1603, %v1604
    %v1606 = vrot.slane %v1605, 2
    %v1607 = vadd.f32 %v1605, %v1606
    %v1608 = vrot.slane %v1607, 1
    %v1609 = vadd.f32 %v1607, %v1608
    %v1610 = vadd.f32 %v1600, %v1609
    %v1611 = vmul.f32 %v1610, 0.03125
    %v1612 = vsub.f32 %v1457, %v1611
    %v1613 = vsub.f32 %v1458, %v1611
    %v1614 = vsub.f32 %v1536, %v1611
    %v1615 = vsub.f32 %v1537, %v1611
    %v1616 = vmul.f32 %v1612, %v1612
    %v1617 = vmul.f32 %v1613, %v1613
    %v1618 = vsel %vm458, %v1616, 0.0
    %v1619 = vsel %vm458, %v1617, 0.0
    %v1620 = vadd.f32 %v1618, %v1619
    %v1621 = vrot.slane %v1620, 4
    %v1622 = vadd.f32 %v1620, %v1621
    %v1623 = vrot.slane %v1622, 2
    %v1624 = vadd.f32 %v1622, %v1623
    %v1625 = vrot.slane %v1624, 1
    %v1626 = vadd.f32 %v1624, %v1625
    %v1627 = vmul.f32 %v1614, %v1614
    %v1628 = vmul.f32 %v1615, %v1615
    %v1629 = vsel %vm458, %v1627, 0.0
    %v1630 = vsel %vm458, %v1628, 0.0
    %v1631 = vadd.f32 %v1629, %v1630
    %v1632 = vrot.slane %v1631, 4
    %v1633 = vadd.f32 %v1631, %v1632
    %v1634 = vrot.slane %v1633, 2
    %v1635 = vadd.f32 %v1633, %v1634
    %v1636 = vrot.slane %v1635, 1
    %v1637 = vadd.f32 %v1635, %v1636
    %v1638 = vadd.f32 %v1626, %v1637
    %v1639 = vmul.f32 %v1638, 0.03125
    %v1640 = vadd.f32 %v1639, 1e-05
    %v1641 = vrsqrt.pop %v1640
    %v1642 = vmul.f32 %v1612, %v1641
    %v1643 = vmul.f32 %v1613, %v1641
    %v1644 = vmul.f32 %v1614, %v1641
    %v1645 = vmul.f32 %v1615, %v1641
    %v1647 = vsel %vm458, %v1642, 0
    %v1650 = vsel %vm458, %v1643, 0
    %1652 = vmatprep.subr.mxu0 0.0
    %1653 = vmatpush1.msra.mxu0 %v521
    %1654 = vmatprep.subr.mxu0 0.0
    %1655 = vmatpush1.msra.mxu0 %v522
    %1656 = vmatprep.subr.mxu0 0.0
    %1657 = vmatpush1.msra.mxu0 %v523
    %1658 = vmatprep.subr.mxu0 0.0
    %1659 = vmatpush1.msra.mxu0 %v524
    %1660 = vmatprep.subr.mxu0 0.0
    %1661 = vmatpush1.msra.mxu0 %v525
    %1662 = vmatprep.subr.mxu0 0.0
    %1663 = vmatpush1.msra.mxu0 %v526
    %1664 = vmatprep.subr.mxu0 0.0
    %1665 = vmatpush1.msra.mxu0 %v527
    %1666 = vmatprep.subr.mxu0 0.0
    %1667 = vmatpush1.msra.mxu0 %v528
    %1668 = vmatprep.subr.mxu0 0.0
    %1669 = vmatpush1.msra.mxu0 %v538
    %1670 = vmatprep.subr.mxu0 0.0
    %1671 = vmatpush1.msra.mxu0 0.0
    %1672 = vmatprep.subr.mxu0 0.0
    %1673 = vmatpush1.msra.mxu0 0.0
    %1674 = vmatprep.subr.mxu0 0.0
    %1675 = vmatpush1.msra.mxu0 0.0
    %1676 = vmatprep.subr.mxu0 0.0
    %1677 = vmatpush1.msra.mxu0 0.0
    %1678 = vmatprep.subr.mxu0 0.0
    %1679 = vmatpush1.msra.mxu0 0.0
    %1680 = vmatprep.subr.mxu0 0.0
    %1681 = vmatpush1.msra.mxu0 0.0
    %1682 = vmatprep.subr.mxu0 0.0
    %1683 = vmatpush1.msra.mxu0 0.0
    %1684 = vmatprep.subr.mxu0 0.0
    %1685 = vmatpush1.msra.mxu0 0.0
    %1686 = vmatprep.subr.mxu0 0.0
    %1687 = vmatpush1.msra.mxu0 0.0
    %1688 = vmatprep.subr.mxu0 0.0
    %1689 = vmatpush1.msra.mxu0 0.0
    %1690 = vmatprep.subr.mxu0 0.0
    %1691 = vmatpush1.msra.mxu0 0.0
    %1692 = vmatprep.subr.mxu0 0.0
    %1693 = vmatpush1.msra.mxu0 0.0
    %1694 = vmatprep.subr.mxu0 0.0
    %1695 = vmatpush1.msra.mxu0 0.0
    %1696 = vmatprep.subr.mxu0 0.0
    %1697 = vmatpush1.msra.mxu0 0.0
    %1698 = vmatprep.subr.mxu0 0.0
    %1699 = vmatpush1.msra.mxu0 0.0
    %1700 = vmatprep.subr.mxu0 0.0
    %1701 = vmatpush1.msra.mxu0 0.0
    %1702 = vmatprep.subr.mxu0 0.0
    %1703 = vmatpush1.msra.mxu0 0.0
    %1704 = vmatprep.subr.mxu0 0.0
    %1705 = vmatpush1.msra.mxu0 0.0
    %1706 = vmatprep.subr.mxu0 0.0
    %1707 = vmatpush1.msra.mxu0 0.0
    %1708 = vmatprep.subr.mxu0 0.0
    %1709 = vmatpush1.msra.mxu0 0.0
    %1710 = vmatprep.subr.mxu0 0.0
    %1711 = vmatpush1.msra.mxu0 0.0
    %1712 = vmatprep.subr.mxu0 0.0
    %1713 = vmatpush1.msra.mxu0 0.0
    %1714 = vmatprep.subr.mxu0 0.0
    %1715 = vmatpush1.msra.mxu0 0.0
    %1716 = vmatprep.mubr.f32.mxu0 0.0
    %1717 = vmatmul.mubr.f32.gmra.mrb[0].mxu0 %v1647
    %v1718 = vpop.f32.mrb[0].mxu0
    %v1719 = vadd.f32 0.0, %v1718
    %v1720 = vpop.f32.mrb[0].mxu0
    %1721 = vmatprep.mubr.f32.mxu0 0.0
    %1722 = vmatmul.mubr.f32.gmra.mrb[0].mxu0 %v1650
    %v1723 = vpop.f32.mrb[0].mxu0
    %v1724 = vadd.f32 0.0, %v1723
    %v1725 = vpop.f32.mrb[0].mxu0
    %1726 = vdwg.mxu0
    %v1728 = vsel %vm403, %v1588, 0
    %v1731 = vsel %vm403, %v1589, 0
    %1733 = vmatprep.subr.mxu0 0.0
    %1734 = vmatpush1.msra.mxu0 %v513
    %1735 = vmatprep.subr.mxu0 0.0
    %1736 = vmatpush1.msra.mxu0 %v514
    %1737 = vmatprep.subr.mxu0 0.0
    %1738 = vmatpush1.msra.mxu0 %v515
    %1739 = vmatprep.subr.mxu0 0.0
    %1740 = vmatpush1.msra.mxu0 %v516
    %1741 = vmatprep.subr.mxu0 0.0
    %1742 = vmatpush1.msra.mxu0 %v517
    %1743 = vmatprep.subr.mxu0 0.0
    %1744 = vmatpush1.msra.mxu0 %v518
    %1745 = vmatprep.subr.mxu0 0.0
    %1746 = vmatpush1.msra.mxu0 %v519
    %1747 = vmatprep.subr.mxu0 0.0
    %1748 = vmatpush1.msra.mxu0 %v520
    %1749 = vmatprep.subr.mxu0 0.0
    %1750 = vmatpush1.msra.mxu0 0.0
    %1751 = vmatprep.subr.mxu0 0.0
    %1752 = vmatpush1.msra.mxu0 0.0
    %1753 = vmatprep.subr.mxu0 0.0
    %1754 = vmatpush1.msra.mxu0 0.0
    %1755 = vmatprep.subr.mxu0 0.0
    %1756 = vmatpush1.msra.mxu0 0.0
    %1757 = vmatprep.subr.mxu0 0.0
    %1758 = vmatpush1.msra.mxu0 0.0
    %1759 = vmatprep.subr.mxu0 0.0
    %1760 = vmatpush1.msra.mxu0 0.0
    %1761 = vmatprep.subr.mxu0 0.0
    %1762 = vmatpush1.msra.mxu0 0.0
    %1763 = vmatprep.subr.mxu0 0.0
    %1764 = vmatpush1.msra.mxu0 0.0
    %1765 = vmatprep.subr.mxu0 0.0
    %1766 = vmatpush1.msra.mxu0 0.0
    %1767 = vmatprep.subr.mxu0 0.0
    %1768 = vmatpush1.msra.mxu0 0.0
    %1769 = vmatprep.subr.mxu0 0.0
    %1770 = vmatpush1.msra.mxu0 0.0
    %1771 = vmatprep.subr.mxu0 0.0
    %1772 = vmatpush1.msra.mxu0 0.0
    %1773 = vmatprep.subr.mxu0 0.0
    %1774 = vmatpush1.msra.mxu0 0.0
    %1775 = vmatprep.subr.mxu0 0.0
    %1776 = vmatpush1.msra.mxu0 0.0
    %1777 = vmatprep.subr.mxu0 0.0
    %1778 = vmatpush1.msra.mxu0 0.0
    %1779 = vmatprep.subr.mxu0 0.0
    %1780 = vmatpush1.msra.mxu0 0.0
    %1781 = vmatprep.subr.mxu0 0.0
    %1782 = vmatpush1.msra.mxu0 0.0
    %1783 = vmatprep.subr.mxu0 0.0
    %1784 = vmatpush1.msra.mxu0 0.0
    %1785 = vmatprep.subr.mxu0 0.0
    %1786 = vmatpush1.msra.mxu0 0.0
    %1787 = vmatprep.subr.mxu0 0.0
    %1788 = vmatpush1.msra.mxu0 0.0
    %1789 = vmatprep.subr.mxu0 0.0
    %1790 = vmatpush1.msra.mxu0 0.0
    %1791 = vmatprep.subr.mxu0 0.0
    %1792 = vmatpush1.msra.mxu0 0.0
    %1793 = vmatprep.subr.mxu0 0.0
    %1794 = vmatpush1.msra.mxu0 0.0
    %1795 = vmatprep.subr.mxu0 0.0
    %1796 = vmatpush1.msra.mxu0 0.0
    %1797 = vmatprep.mubr.f32.mxu0 0.0
    %1798 = vmatmul.mubr.f32.gmra.mrb[0].mxu0 %v1728
    %v1799 = vpop.f32.mrb[0].mxu0
    %v1800 = vadd.f32 %v1719, %v1799
    %v1801 = vpop.f32.mrb[0].mxu0
    %1802 = vmatprep.mubr.f32.mxu0 0.0
    %1803 = vmatmul.mubr.f32.gmra.mrb[0].mxu0 %v1731
    %v1804 = vpop.f32.mrb[0].mxu0
    %v1805 = vadd.f32 %v1724, %v1804
    %v1806 = vpop.f32.mrb[0].mxu0
    %1807 = vdwg.mxu0
    %v1809 = vsel %vm458, %v1644, 0
    %v1812 = vsel %vm458, %v1645, 0
    %1814 = vmatprep.subr.mxu0 0.0
    %1815 = vmatpush1.msra.mxu0 %v706
    %1816 = vmatprep.subr.mxu0 0.0
    %1817 = vmatpush1.msra.mxu0 %v707
    %1818 = vmatprep.subr.mxu0 0.0
    %1819 = vmatpush1.msra.mxu0 %v708
    %1820 = vmatprep.subr.mxu0 0.0
    %1821 = vmatpush1.msra.mxu0 %v709
    %1822 = vmatprep.subr.mxu0 0.0
    %1823 = vmatpush1.msra.mxu0 %v710
    %1824 = vmatprep.subr.mxu0 0.0
    %1825 = vmatpush1.msra.mxu0 %v711
    %1826 = vmatprep.subr.mxu0 0.0
    %1827 = vmatpush1.msra.mxu0 %v712
    %1828 = vmatprep.subr.mxu0 0.0
    %1829 = vmatpush1.msra.mxu0 %v713
    %1830 = vmatprep.subr.mxu0 0.0
    %1831 = vmatpush1.msra.mxu0 %v722
    %1832 = vmatprep.subr.mxu0 0.0
    %1833 = vmatpush1.msra.mxu0 0.0
    %1834 = vmatprep.subr.mxu0 0.0
    %1835 = vmatpush1.msra.mxu0 0.0
    %1836 = vmatprep.subr.mxu0 0.0
    %1837 = vmatpush1.msra.mxu0 0.0
    %1838 = vmatprep.subr.mxu0 0.0
    %1839 = vmatpush1.msra.mxu0 0.0
    %1840 = vmatprep.subr.mxu0 0.0
    %1841 = vmatpush1.msra.mxu0 0.0
    %1842 = vmatprep.subr.mxu0 0.0
    %1843 = vmatpush1.msra.mxu0 0.0
    %1844 = vmatprep.subr.mxu0 0.0
    %1845 = vmatpush1.msra.mxu0 0.0
    %1846 = vmatprep.subr.mxu0 0.0
    %1847 = vmatpush1.msra.mxu0 0.0
    %1848 = vmatprep.subr.mxu0 0.0
    %1849 = vmatpush1.msra.mxu0 0.0
    %1850 = vmatprep.subr.mxu0 0.0
    %1851 = vmatpush1.msra.mxu0 0.0
    %1852 = vmatprep.subr.mxu0 0.0
    %1853 = vmatpush1.msra.mxu0 0.0
    %1854 = vmatprep.subr.mxu0 0.0
    %1855 = vmatpush1.msra.mxu0 0.0
    %1856 = vmatprep.subr.mxu0 0.0
    %1857 = vmatpush1.msra.mxu0 0.0
    %1858 = vmatprep.subr.mxu0 0.0
    %1859 = vmatpush1.msra.mxu0 0.0
    %1860 = vmatprep.subr.mxu0 0.0
    %1861 = vmatpush1.msra.mxu0 0.0
    %1862 = vmatprep.subr.mxu0 0.0
    %1863 = vmatpush1.msra.mxu0 0.0
    %1864 = vmatprep.subr.mxu0 0.0
    %1865 = vmatpush1.msra.mxu0 0.0
    %1866 = vmatprep.subr.mxu0 0.0
    %1867 = vmatpush1.msra.mxu0 0.0
    %1868 = vmatprep.subr.mxu0 0.0
    %1869 = vmatpush1.msra.mxu0 0.0
    %1870 = vmatprep.subr.mxu0 0.0
    %1871 = vmatpush1.msra.mxu0 0.0
    %1872 = vmatprep.subr.mxu0 0.0
    %1873 = vmatpush1.msra.mxu0 0.0
    %1874 = vmatprep.subr.mxu0 0.0
    %1875 = vmatpush1.msra.mxu0 0.0
    %1876 = vmatprep.subr.mxu0 0.0
    %1877 = vmatpush1.msra.mxu0 0.0
    %1878 = vmatprep.mubr.f32.mxu0 0.0
    %1879 = vmatmul.mubr.f32.gmra.mrb[0].mxu0 %v1809
    %v1880 = vpop.f32.mrb[0].mxu0
    %v1881 = vadd.f32 0.0, %v1880
    %v1882 = vpop.f32.mrb[0].mxu0
    %1883 = vmatprep.mubr.f32.mxu0 0.0
    %1884 = vmatmul.mubr.f32.gmra.mrb[0].mxu0 %v1812
    %v1885 = vpop.f32.mrb[0].mxu0
    %v1886 = vadd.f32 0.0, %v1885
    %v1887 = vpop.f32.mrb[0].mxu0
    %1888 = vdwg.mxu0
    %v1890 = vsel %vm403, %v1590, 0
    %v1893 = vsel %vm403, %v1591, 0
    %1895 = vmatprep.subr.mxu0 0.0
    %1896 = vmatpush1.msra.mxu0 %v697
    %1897 = vmatprep.subr.mxu0 0.0
    %1898 = vmatpush1.msra.mxu0 %v698
    %1899 = vmatprep.subr.mxu0 0.0
    %1900 = vmatpush1.msra.mxu0 %v699
    %1901 = vmatprep.subr.mxu0 0.0
    %1902 = vmatpush1.msra.mxu0 %v700
    %1903 = vmatprep.subr.mxu0 0.0
    %1904 = vmatpush1.msra.mxu0 %v701
    %1905 = vmatprep.subr.mxu0 0.0
    %1906 = vmatpush1.msra.mxu0 %v702
    %1907 = vmatprep.subr.mxu0 0.0
    %1908 = vmatpush1.msra.mxu0 %v703
    %1909 = vmatprep.subr.mxu0 0.0
    %1910 = vmatpush1.msra.mxu0 %v704
    %1911 = vmatprep.subr.mxu0 0.0
    %1912 = vmatpush1.msra.mxu0 0.0
    %1913 = vmatprep.subr.mxu0 0.0
    %1914 = vmatpush1.msra.mxu0 0.0
    %1915 = vmatprep.subr.mxu0 0.0
    %1916 = vmatpush1.msra.mxu0 0.0
    %1917 = vmatprep.subr.mxu0 0.0
    %1918 = vmatpush1.msra.mxu0 0.0
    %1919 = vmatprep.subr.mxu0 0.0
    %1920 = vmatpush1.msra.mxu0 0.0
    %1921 = vmatprep.subr.mxu0 0.0
    %1922 = vmatpush1.msra.mxu0 0.0
    %1923 = vmatprep.subr.mxu0 0.0
    %1924 = vmatpush1.msra.mxu0 0.0
    %1925 = vmatprep.subr.mxu0 0.0
    %1926 = vmatpush1.msra.mxu0 0.0
    %1927 = vmatprep.subr.mxu0 0.0
    %1928 = vmatpush1.msra.mxu0 0.0
    %1929 = vmatprep.subr.mxu0 0.0
    %1930 = vmatpush1.msra.mxu0 0.0
    %1931 = vmatprep.subr.mxu0 0.0
    %1932 = vmatpush1.msra.mxu0 0.0
    %1933 = vmatprep.subr.mxu0 0.0
    %1934 = vmatpush1.msra.mxu0 0.0
    %1935 = vmatprep.subr.mxu0 0.0
    %1936 = vmatpush1.msra.mxu0 0.0
    %1937 = vmatprep.subr.mxu0 0.0
    %1938 = vmatpush1.msra.mxu0 0.0
    %1939 = vmatprep.subr.mxu0 0.0
    %1940 = vmatpush1.msra.mxu0 0.0
    %1941 = vmatprep.subr.mxu0 0.0
    %1942 = vmatpush1.msra.mxu0 0.0
    %1943 = vmatprep.subr.mxu0 0.0
    %1944 = vmatpush1.msra.mxu0 0.0
    %1945 = vmatprep.subr.mxu0 0.0
    %1946 = vmatpush1.msra.mxu0 0.0
    %1947 = vmatprep.subr.mxu0 0.0
    %1948 = vmatpush1.msra.mxu0 0.0
    %1949 = vmatprep.subr.mxu0 0.0
    %1950 = vmatpush1.msra.mxu0 0.0
    %1951 = vmatprep.subr.mxu0 0.0
    %1952 = vmatpush1.msra.mxu0 0.0
    %1953 = vmatprep.subr.mxu0 0.0
    %1954 = vmatpush1.msra.mxu0 0.0
    %1955 = vmatprep.subr.mxu0 0.0
    %1956 = vmatpush1.msra.mxu0 0.0
    %1957 = vmatprep.subr.mxu0 0.0
    %1958 = vmatpush1.msra.mxu0 0.0
    %1959 = vmatprep.mubr.f32.mxu0 0.0
    %1960 = vmatmul.mubr.f32.gmra.mrb[0].mxu0 %v1890
    %v1961 = vpop.f32.mrb[0].mxu0
    %v1962 = vadd.f32 %v1881, %v1961
    %v1963 = vpop.f32.mrb[0].mxu0
    %1964 = vmatprep.mubr.f32.mxu0 0.0
    %1965 = vmatmul.mubr.f32.gmra.mrb[0].mxu0 %v1893
    %v1966 = vpop.f32.mrb[0].mxu0
    %v1967 = vadd.f32 %v1886, %v1966
    %v1968 = vpop.f32.mrb[0].mxu0
    %1969 = vdwg.mxu0
    %v1970 = vsel %vm403, %v1800, 0.0
    %1971 = vadd.xlane.f32.xlu0 %v1970
    %v1972 = vpop.xlane.xlu0 %1971
    %v1973 = vsel %vm403, %v1805, 0.0
    %1974 = vadd.xlane.f32.xlu0 %v1973
    %v1975 = vpop.xlane.xlu0 %1974
    %v1976 = vsel %vm403, %v1962, 0.0
    %1977 = vadd.xlane.f32.xlu0 %v1976
    %v1978 = vpop.xlane.xlu0 %1977
    %v1979 = vsel %vm403, %v1967, 0.0
    %1980 = vadd.xlane.f32.xlu0 %v1979
    %v1981 = vpop.xlane.xlu0 %1980
    %v1982 = vadd.f32 %v1972, %v1978
    %v1983 = vadd.f32 %v1975, %v1981
    %v1984 = vmul.f32 %v1982, 0.0078125
    %v1985 = vmul.f32 %v1983, 0.0078125
    %v1986 = vsub.f32 %v1800, %v1984
    %v1987 = vsub.f32 %v1805, %v1985
    %v1988 = vsub.f32 %v1962, %v1984
    %v1989 = vsub.f32 %v1967, %v1985
    %v1990 = vmul.f32 %v1986, %v1986
    %v1991 = vmul.f32 %v1987, %v1987
    %v1992 = vsel %vm403, %v1990, 0.0
    %1993 = vadd.xlane.f32.xlu0 %v1992
    %v1994 = vpop.xlane.xlu0 %1993
    %v1995 = vsel %vm403, %v1991, 0.0
    %1996 = vadd.xlane.f32.xlu0 %v1995
    %v1997 = vpop.xlane.xlu0 %1996
    %v1998 = vmul.f32 %v1988, %v1988
    %v1999 = vmul.f32 %v1989, %v1989
    %v2000 = vsel %vm403, %v1998, 0.0
    %2001 = vadd.xlane.f32.xlu0 %v2000
    %v2002 = vpop.xlane.xlu0 %2001
    %v2003 = vsel %vm403, %v1999, 0.0
    %2004 = vadd.xlane.f32.xlu0 %v2003
    %v2005 = vpop.xlane.xlu0 %2004
    %v2006 = vadd.f32 %v1994, %v2002
    %v2007 = vadd.f32 %v1997, %v2005
    %v2008 = vmul.f32 %v2006, 0.0078125
    %v2009 = vmul.f32 %v2007, 0.0078125
    %v2010 = vadd.f32 %v2008, 1e-05
    %v2011 = vadd.f32 %v2009, 1e-05
    %v2012 = vrsqrt.pop %v2010
    %v2013 = vrsqrt.pop %v2011
    %v2014 = vmul.f32 %v1986, %v2012
    %v2015 = vmul.f32 %v1987, %v2013
    %v2016 = vmax.f32 %v2014, 0.0
    %v2017 = vmax.f32 %v2015, 0.0
    %v2018 = vadd.f32 %v2016, %v64
    %v2019 = vadd.f32 %v2017, %v65
    %2020 = vst.msk [vmem:[#allocation2] sm:$0xff] %vm403, %v2018
    %2021 = vst.msk [vmem:[#allocation2 + $0x8] sm:$0xff] %vm403, %v2019
    %v2022 = vmul.f32 %v1988, %v2012
    %v2023 = vmul.f32 %v1989, %v2013
    %v2024 = vmax.f32 %v2022, 0.0
    %v2025 = vmax.f32 %v2023, 0.0
    %v2026 = vld [vmem:[%s66] sm:$0xff]
    %v2027 = vld [vmem:[%s66 + $0x8] sm:$0xff]
    %v2028 = vadd.f32 %v2024, %v2026
    %v2029 = vadd.f32 %v2025, %v2027
    %s2030 = scalar_lea.vmem [#allocation2], 16
    %2031 = vst.msk [vmem:[%s2030] sm:$0xff] %vm403, %v2028
    %2032 = vst.msk [vmem:[%s2030 + $0x8] sm:$0xff] %vm403, %v2029
    // Predicated region
    $region42: #{ds_hgnn_layer_forward.3} parent=1 // pred_check
      _
    $region43: #{ds_hgnn_layer_forward.3} parent=1 // pred_check_branch
      %2034 = sbr.rel (0) target = $region45
    $region44: #{ds_hgnn_layer_forward.3} parent=1 // pred_region
      %s2036 = ssub.s32 512, 512
      %2037 = vsyncadd [#allocation3], %s2036
      %s2038 = sshll.u32 [#allocation2], 4
      %s2039 = int_to_ptr.vmem [resolvable:$true] %s2038
      %2044 = dma.vmem_to_hbm [thread:$0]  %s2039, 512, %s10, [#allocation3], 128, 128, 8
    $region45: #{ds_hgnn_layer_forward.3} parent=1 // pred_fallthru
      _
    // Predicated region
    $region46: #{ds_hgnn_layer_forward.3} parent=1 // pred_check
      _
    $region47: #{ds_hgnn_layer_forward.3} parent=1 // pred_check_branch
      %2046 = sbr.rel (0) target = $region49
    $region48: #{ds_hgnn_layer_forward.3} parent=1 // pred_region
      %2047 = dma.done [#allocation3], 512
    $region49: #{ds_hgnn_layer_forward.3} parent=1 // pred_fallthru
      _
    %2048 = vsyncpa [#allocation3], 1

</llo_original>
